<compile_context>
chip_gen: v7x
topology: tpu7x:2x2x1
jax: 0.10.0
libtpu: 0.0.40
codegen_flags: <defaults>
</compile_context>

<pallas_src>
import functools

import jax
import jax.numpy as jnp
from jax.experimental import pallas as pl
from jax.experimental.pallas import tpu as pltpu


# ----------------------------------------------------------------------------- pass 1
def linear_stats_kernel(img_ref, w_ref, lin_ref, sum_ref, ssq_ref):
    """Fused stacked-[s;o] linear projection + BN batch-stat accumulation.

    grid = (half h in {0:s, 1:o}, batch-tile k)

    img_ref : (tile_B, IMG) bf16   stacked image rows (s rows first, then o rows)
    w_ref   : (IMG, D)      bf16   pre-transposed Linear weight (constant block)
    lin_ref : (tile_B, D)   bf16   linear output (bias dropped; cancels under BN)
    sum_ref : (1, 1, D)     f32    per-half running sum    (block h)
    ssq_ref : (1, 1, D)     f32    per-half running sum^2  (block h)
    """
    lin = jnp.dot(img_ref[...], w_ref[...], preferred_element_type=jnp.float32)

    # New accumulator block starts at the first batch tile of each half -> zero it.
    @pl.when(pl.program_id(1) == 0)
    def _init():
        sum_ref[...] = jnp.zeros_like(sum_ref)
        ssq_ref[...] = jnp.zeros_like(ssq_ref)

    sum_ref[...] += jnp.sum(lin, axis=0, keepdims=True)[None, :, :]
    ssq_ref[...] += jnp.sum(lin * lin, axis=0, keepdims=True)[None, :, :]

    # Stats taken from the f32 MXU result above; the HBM round trip is bf16.
    lin_ref[...] = lin.astype(lin_ref.dtype)


# ----------------------------------------------------------------------------- pass 2
def score_kernel(sum_ref, ssq_ref, bn_ref, rtbl_ref, ridx_ref,
                 s_lin_ref, o_lin_ref, e_s_ref, e_o_ref, out_ref,
                 *, mult, psi, eps, inv_b, d):
    """In-kernel BN fold + in-kernel relation gather + compatibility/base scores."""
    # ---- fold training-mode BN into per-half scale/shift (tiny (2,1,D) math) -------
    mean = sum_ref[...] * inv_b                                   # (2, 1, D)
    var = jnp.maximum(ssq_ref[...] * inv_b - mean * mean, 0.0)
    gamma = bn_ref[0:1, :][None, :, :]                            # (1, 1, D)
    beta = bn_ref[1:2, :][None, :, :]
    scale = jax.lax.rsqrt(var + eps) * gamma                      # (2, 1, D)
    shift = beta - mean * scale
    s_scale, o_scale = scale[0], scale[1]                         # (1, D) each
    s_shift, o_shift = shift[0], shift[1]

    # ---- in-kernel relation gather: one-hot (tile_b, rel) @ (rel, 3D) f32 MXU ------
    tile_b = ridx_ref.shape[0]
    rel = rtbl_ref.shape[0]
    lane = jax.lax.broadcasted_iota(jnp.int32, (tile_b, rel), 1)
    onehot = jnp.where(ridx_ref[...] == lane, 1.0, 0.0).astype(jnp.float32)
    r_all = jnp.dot(onehot, rtbl_ref[...], preferred_element_type=jnp.float32)
    r_base = r_all[:, 0:d]
    r_ht = r_all[:, d:2 * d]
    r_tt = r_all[:, 2 * d:3 * d]

    # ---- normalize the projected image rows (bf16 -> f32) and score ----------------
    s_image = s_lin_ref[...].astype(jnp.float32) * s_scale + s_shift   # (tile_b, D)
    o_image = o_lin_ref[...].astype(jnp.float32) * o_scale + o_shift

    head = jnp.sum(s_image * r_ht, axis=-1, keepdims=True)             # (tile_b, 1)
    tail = jnp.sum(o_image * r_tt, axis=-1, keepdims=True)
    base = jnp.sum(e_s_ref[...] * r_base * e_o_ref[...], axis=-1, keepdims=True)

    sig = jax.nn.sigmoid
    out_ref[...] = mult * sig(psi * base) * sig(psi * head) * sig(psi * tail)


# ----------------------------------------------------------------------------- wrapper
def only_image_forward(params, s, r, o, *, mult=20.0, psi=1.0, eps=1e-5, tile_b=512):
    """s, r, o: (B, 1) int32 index arrays (matches the PyTorch module usage)."""
    s_idx, r_idx, o_idx = s[:, 0], r[:, 0], o[:, 0]
    B = s_idx.shape[0]
    D = params["E_base"].shape[1]
    IMG = params["image_embedding_bf16"].shape[1]

    tile_b = min(tile_b, B)
    assert B % tile_b == 0, "batch must be a multiple of tile_b"
    assert tile_b % 16 == 0, "tile_b must be a multiple of 16 (bf16 sublane tile)"
    assert D % 128 == 0 and IMG % 128 == 0, "D and IMG must be lane (128) multiples"
    tiles_per_half = B // tile_b

    # --- gathers (plain JAX glue); s and o image rows stacked for one matmul --------
    cat_idx = jnp.concatenate([s_idx, o_idx], axis=0)                      # (2B,)
    img_stacked = jnp.take(params["image_embedding_bf16"], cat_idx, axis=0)  # (2B, IMG) bf16
    e_s = params["E_base"][s_idx]                                          # (B, D) f32
    e_o = params["E_base"][o_idx]
    w_t = params["linear_w_t_bf16"]                                        # (IMG, D) bf16

    # ---------------- pass 1: tiled fused matmul + full-batch BN statistics ---------
    lin, sums, ssq = pl.pallas_call(
        linear_stats_kernel,
        out_shape=(jax.ShapeDtypeStruct((2 * B, D), jnp.bfloat16),
                   jax.ShapeDtypeStruct((2, 1, D), jnp.float32),
                   jax.ShapeDtypeStruct((2, 1, D), jnp.float32)),
        grid=(2, tiles_per_half),
        in_specs=[
            pl.BlockSpec((tile_b, IMG), lambda h, k: (h * tiles_per_half + k, 0)),
            pl.BlockSpec((IMG, D), lambda h, k: (0, 0)),          # weight (resident)
        ],
        out_specs=(
            pl.BlockSpec((tile_b, D), lambda h, k: (h * tiles_per_half + k, 0)),
            pl.BlockSpec((1, 1, D), lambda h, k: (h, 0, 0)),      # per-half sum
            pl.BlockSpec((1, 1, D), lambda h, k: (h, 0, 0)),      # per-half sum^2
        ),
        compiler_params=pltpu.CompilerParams(
            dimension_semantics=("parallel", "arbitrary")),
    )(img_stacked, w_t)

    # tiny resident side inputs for pass 2 (a few KiB; off the heavy HBM path)
    bn = jnp.stack([params["bn_gamma"], params["bn_beta"]], axis=0)        # (2, D)
    r_tbl = jnp.concatenate(
        [params["R_base"], params["R_ht"], params["R_tt"]], axis=1)        # (rel, 3D)
    rel = r_tbl.shape[0]
    rel_pad = ((rel + 7) // 8) * 8
    if rel_pad != rel:
        r_tbl = jnp.pad(r_tbl, ((0, rel_pad - rel), (0, 0)))
    r_col = r.astype(jnp.int32).reshape(B, 1)

    # ---------------- pass 2: tiled, megacore-parallel BN-fold + gather + score -----
    row_spec = pl.BlockSpec((tile_b, D), lambda i: (i, 0))
    scores = pl.pallas_call(
        functools.partial(score_kernel, mult=float(mult), psi=float(psi),
                          eps=float(eps), inv_b=1.0 / float(B), d=D),
        out_shape=jax.ShapeDtypeStruct((B, 1), jnp.float32),
        grid=(tiles_per_half,),
        in_specs=[
            pl.BlockSpec((2, 1, D), lambda i: (0, 0, 0)),                  # sums
            pl.BlockSpec((2, 1, D), lambda i: (0, 0, 0)),                  # sum-sq
            pl.BlockSpec((2, D), lambda i: (0, 0)),                        # gamma/beta
            pl.BlockSpec(r_tbl.shape, lambda i: (0, 0)),                   # rel tables
            pl.BlockSpec((tile_b, 1), lambda i: (i, 0)),                   # r indices
            row_spec,                                                      # s_lin (bf16)
            pl.BlockSpec((tile_b, D), lambda i: (i + tiles_per_half, 0)),  # o_lin (bf16)
            row_spec,                                                      # e_s
            row_spec,                                                      # e_o
        ],
        out_specs=pl.BlockSpec((tile_b, 1), lambda i: (i, 0)),
        compiler_params=pltpu.CompilerParams(dimension_semantics=("parallel",)),
    )(sums, ssq, bn, r_tbl, r_col, lin, lin, e_s, e_o)
    return scores                                                          # (B, 1)


# ----------------------------------------------------------------------------- references
def reference_forward(params, s, r, o, *, mult=20.0, psi=1.0, eps=1e-5):
    """Pure-jnp f32 reference with the PyTorch module semantics (bias + training BN)."""
    s_idx, r_idx, o_idx = s[:, 0], r[:, 0], o[:, 0]
    s_img = params["image_embedding"][s_idx]
    o_img = params["image_embedding"][o_idx]
    e_s = params["E_base"][s_idx]
    e_o = params["E_base"][o_idx]
    r_base = params["R_base"][r_idx]
    r_ht = params["R_ht"][r_idx]
    r_tt = params["R_tt"][r_idx]

    w, b = params["linear_w"], params["linear_b"]
    s_lin = jnp.dot(s_img, w.T) + b
    o_lin = jnp.dot(o_img, w.T) + b

    def bn(x):
        m = jnp.mean(x, axis=0, keepdims=True)
        v = jnp.mean((x - m) ** 2, axis=0, keepdims=True)
        return (x - m) / jnp.sqrt(v + eps) * params["bn_gamma"] + params["bn_beta"]

    s_image, o_image = bn(s_lin), bn(o_lin)
    head = jnp.sum(s_image * r_ht, axis=-1, keepdims=True)
    tail = jnp.sum(o_image * r_tt, axis=-1, keepdims=True)
    base = jnp.sum(e_s * r_base * e_o, axis=-1, keepdims=True)
    sig = jax.nn.sigmoid
    return mult * sig(psi * base) * sig(psi * head) * sig(psi * tail)


def structural_reference(params, s, r, o, *, mult=20.0, psi=1.0, eps=1e-5):
    """Mirror of the kernel numerics: bf16 matmul inputs, bias dropped, f32 stats via
    E[x^2]-E[x]^2, bf16 lin round trip, folded scale/shift affine."""
    s_idx, r_idx, o_idx = s[:, 0], r[:, 0], o[:, 0]
    s_img = params["image_embedding_bf16"][s_idx]
    o_img = params["image_embedding_bf16"][o_idx]
    w_t = params["linear_w_t_bf16"]
    e_s = params["E_base"][s_idx]
    e_o = params["E_base"][o_idx]
    r_base = params["R_base"][r_idx]
    r_ht = params["R_ht"][r_idx]
    r_tt = params["R_tt"][r_idx]

    s_lin = jnp.dot(s_img, w_t, preferred_element_type=jnp.float32)
    o_lin = jnp.dot(o_img, w_t, preferred_element_type=jnp.float32)

    def fold(x):
        m = jnp.mean(x, axis=0, keepdims=True)
        v = jnp.maximum(jnp.mean(x * x, axis=0, keepdims=True) - m * m, 0.0)
        scale = jax.lax.rsqrt(v + eps) * params["bn_gamma"]
        shift = params["bn_beta"] - m * scale
        return scale, shift

    s_scale, s_shift = fold(s_lin)
    o_scale, o_shift = fold(o_lin)
    s_image = s_lin.astype(jnp.bfloat16).astype(jnp.float32) * s_scale + s_shift
    o_image = o_lin.astype(jnp.bfloat16).astype(jnp.float32) * o_scale + o_shift

    head = jnp.sum(s_image * r_ht, axis=-1, keepdims=True)
    tail = jnp.sum(o_image * r_tt, axis=-1, keepdims=True)
    base = jnp.sum(e_s * r_base * e_o, axis=-1, keepdims=True)
    sig = jax.nn.sigmoid
    return mult * sig(psi * base) * sig(psi * head) * sig(psi * tail)


# ----------------------------------------------------------------------------- params
def init_params(key, entity_count, relation_count, embedding_dim, image_dim):
    ks = jax.random.split(key, 7)
    linear_w = jax.random.normal(ks[5], (embedding_dim, image_dim), jnp.float32) * 0.05
    image_embedding = jax.random.uniform(ks[4], (entity_count, image_dim), jnp.float32)
    return {
        # base (DistMult-style) model embeddings
        "E_base": jax.random.normal(ks[0], (entity_count, embedding_dim), jnp.float32) * 0.05,
        "R_base": jax.random.normal(ks[1], (relation_count, embedding_dim), jnp.float32) * 0.05,
        # R_ht / R_tt ~ N(0, 0.05)
        "R_ht": jax.random.normal(ks[2], (relation_count, embedding_dim), jnp.float32) * 0.05,
        "R_tt": jax.random.normal(ks[3], (relation_count, embedding_dim), jnp.float32) * 0.05,
        # frozen image embedding table (last row plays the OOV row) + bf16 copy so the
        # per-step gather feeding pass 1 moves half the HBM bytes.
        "image_embedding": image_embedding,
        "image_embedding_bf16": image_embedding.astype(jnp.bfloat16),
        # nn.Linear(image_dim, embedding_dim): weight (out, in) ~ N(0, 0.05)
        "linear_w": linear_w,
        # pre-transposed + pre-cast once at init so the forward never re-does it
        "linear_w_t_bf16": linear_w.T.astype(jnp.bfloat16),
        "linear_b": jax.random.uniform(ks[6], (embedding_dim,), jnp.float32,
                                       minval=-0.05, maxval=0.05),
        # BatchNorm1d affine params (torch default init)
        "bn_gamma": jnp.ones((embedding_dim,), jnp.float32),
        "bn_beta": jnp.zeros((embedding_dim,), jnp.float32),
    }


if __name__ == "__main__":
    entity_count, relation_count = 64, 8
    embedding_dim, image_dim = 128, 256
    batch = 256

    key = jax.random.PRNGKey(0)
    kp, ks, kr, ko = jax.random.split(key, 4)
    params = init_params(kp, entity_count, relation_count, embedding_dim, image_dim)

    s = jax.random.randint(ks, (batch, 1), 0, entity_count, jnp.int32)
    r = jax.random.randint(kr, (batch, 1), 0, relation_count, jnp.int32)
    o = jax.random.randint(ko, (batch, 1), 0, entity_count, jnp.int32)

    # tile_b=128 exercises the multi-tile BN-statistic accumulation path; the default
    # (tile_b=512, clamped to B=256 here) uses one big tile per half.
    fwd_small = jax.jit(functools.partial(only_image_forward, tile_b=128))
    fwd_default = jax.jit(only_image_forward)

    out = jax.block_until_ready(fwd_small(params, s, r, o))
    out_default = jax.block_until_ready(fwd_default(params, s, r, o))
    assert out.shape == (batch, 1)

    # Tiling invariance: only f32 accumulation order differs between the two tilings.
    tile_err = float(jnp.max(jnp.abs(out - out_default)))
    assert jnp.allclose(out, out_default, atol=1e-3, rtol=1e-3), ("tile mismatch", tile_err)

    # Fidelity vs the f32 PyTorch-style reference (loose tol: bf16 matmul / bf16 lin).
    ref_f32 = reference_forward(params, s, r, o)
    err_f32 = float(jnp.max(jnp.abs(out - ref_f32)))
    assert jnp.allclose(out, ref_f32, atol=5e-2, rtol=5e-2), ("f32-ref mismatch", err_f32)

    # Structural check vs a reference that mirrors the kernel numerics: verifies the
    # two-pass BN statistics, tiling, fused matmul, bf16 lin round trip, in-kernel
    # relation gather and bias-drop plumbing.
    ref_st = structural_reference(params, s, r, o)
    err_st = float(jnp.max(jnp.abs(out - ref_st)))
    assert jnp.allclose(out, ref_st, atol=1e-2, rtol=1e-2), ("structural mismatch", err_st)

    print("KERNEL_OK")
</pallas_src>

<mosaic_0001>
module attributes {stable_mosaic.version = 11 : i64} {
  func.func @linear_stats_kernel(%arg0: i32, %arg1: i32, %arg2: memref<128x256xbf16, #tpu.memory_space<vmem>>, %arg3: memref<256x128xbf16, #tpu.memory_space<vmem>>, %arg4: memref<128x128xbf16, #tpu.memory_space<vmem>>, %arg5: memref<1x1x128xf32, #tpu.memory_space<vmem>>, %arg6: memref<1x1x128xf32, #tpu.memory_space<vmem>>) attributes {dimension_semantics = [#tpu.dimension_semantics<parallel>, #tpu.dimension_semantics<arbitrary>], iteration_bounds = array<i64: 2, 2>, scalar_prefetch = 0 : i64, scratch_operands = 0 : i64, tpu.core_type = #tpu.core_type<tc>, window_params = [{transform_indices = @transform_0, window_bounds = array<i64: 128, 256>}, {pipeline_mode = #tpu.pipeline_mode<synchronous>, transform_indices = @transform_1, window_bounds = array<i64: 256, 128>}, {transform_indices = @transform_2, window_bounds = array<i64: 128, 128>}, {transform_indices = @transform_3, window_bounds = array<i64: 1, 1, 128>}, {transform_indices = @transform_4, window_bounds = array<i64: 1, 1, 128>}]} {
    %c0 = arith.constant 0 : index
    %c0_0 = arith.constant 0 : index
    %0 = vector.load %arg2[%c0, %c0_0] : memref<128x256xbf16, #tpu.memory_space<vmem>>, vector<128x256xbf16>
    %c0_1 = arith.constant 0 : index
    %c0_2 = arith.constant 0 : index
    %1 = vector.load %arg3[%c0_1, %c0_2] : memref<256x128xbf16, #tpu.memory_space<vmem>>, vector<256x128xbf16>
    %cst = arith.constant dense<0.000000e+00> : vector<128x128xf32>
    %2 = tpu.matmul %0, %1, %cst {dimension_numbers = #tpu.dot_dimension_numbers<[1], [0], [0], [1], [0, 0, 1, 1], [], []>} : vector<128x256xbf16>, vector<256x128xbf16>, vector<128x128xf32> -> vector<128x128xf32>
    %c0_i32 = arith.constant 0 : i32
    %3 = arith.cmpi eq, %arg1, %c0_i32 : i32
    %4 = arith.extui %3 : i1 to i32
    %c0_i32_3 = arith.constant 0 : i32
    %5 = arith.cmpi ne, %4, %c0_i32_3 : i32
    scf.if %5 {
      %cst_20 = arith.constant 0.000000e+00 : f32
      %21 = vector.broadcast %cst_20 : f32 to vector<1x1x128xf32>
      %c0_21 = arith.constant 0 : index
      %c0_22 = arith.constant 0 : index
      %c0_23 = arith.constant 0 : index
      %22 = vector.load %arg5[%c0_21, %c0_22, %c0_23] : memref<1x1x128xf32, #tpu.memory_space<vmem>>, vector<1x1x128xf32>
      tpu.vector_store %arg5[%c0_21, %c0_22, %c0_23], %21 {strides = array<i32>} : memref<1x1x128xf32, #tpu.memory_space<vmem>>, vector<1x1x128xf32>,
      %cst_24 = arith.constant 0.000000e+00 : f32
      %23 = vector.broadcast %cst_24 : f32 to vector<1x1x128xf32>
      %c0_25 = arith.constant 0 : index
      %c0_26 = arith.constant 0 : index
      %c0_27 = arith.constant 0 : index
      %24 = vector.load %arg6[%c0_25, %c0_26, %c0_27] : memref<1x1x128xf32, #tpu.memory_space<vmem>>, vector<1x1x128xf32>
      tpu.vector_store %arg6[%c0_25, %c0_26, %c0_27], %23 {strides = array<i32>} : memref<1x1x128xf32, #tpu.memory_space<vmem>>, vector<1x1x128xf32>,
    } else {
    }
    %c0_4 = arith.constant 0 : index
    %c0_5 = arith.constant 0 : index
    %c0_6 = arith.constant 0 : index
    %6 = vector.load %arg5[%c0_4, %c0_5, %c0_6] : memref<1x1x128xf32, #tpu.memory_space<vmem>>, vector<1x1x128xf32>
    %cst_7 = arith.constant dense<0.000000e+00> : vector<128xf32>
    %7 = vector.multi_reduction <add>, %2, %cst_7 [0] : vector<128x128xf32> to vector<128xf32>
    %8 = vector.shape_cast %7 : vector<128xf32> to vector<1x128xf32>
    %9 = vector.shape_cast %8 : vector<1x128xf32> to vector<1x1x128xf32>
    %10 = arith.addf %6, %9 : vector<1x1x128xf32>
    %c0_8 = arith.constant 0 : index
    %c0_9 = arith.constant 0 : index
    %c0_10 = arith.constant 0 : index
    %11 = vector.load %arg5[%c0_8, %c0_9, %c0_10] : memref<1x1x128xf32, #tpu.memory_space<vmem>>, vector<1x1x128xf32>
    tpu.vector_store %arg5[%c0_8, %c0_9, %c0_10], %10 {strides = array<i32>} : memref<1x1x128xf32, #tpu.memory_space<vmem>>, vector<1x1x128xf32>,
    %c0_11 = arith.constant 0 : index
    %c0_12 = arith.constant 0 : index
    %c0_13 = arith.constant 0 : index
    %12 = vector.load %arg6[%c0_11, %c0_12, %c0_13] : memref<1x1x128xf32, #tpu.memory_space<vmem>>, vector<1x1x128xf32>
    %13 = arith.mulf %2, %2 : vector<128x128xf32>
    %cst_14 = arith.constant dense<0.000000e+00> : vector<128xf32>
    %14 = vector.multi_reduction <add>, %13, %cst_14 [0] : vector<128x128xf32> to vector<128xf32>
    %15 = vector.shape_cast %14 : vector<128xf32> to vector<1x128xf32>
    %16 = vector.shape_cast %15 : vector<1x128xf32> to vector<1x1x128xf32>
    %17 = arith.addf %12, %16 : vector<1x1x128xf32>
    %c0_15 = arith.constant 0 : index
    %c0_16 = arith.constant 0 : index
    %c0_17 = arith.constant 0 : index
    %18 = vector.load %arg6[%c0_15, %c0_16, %c0_17] : memref<1x1x128xf32, #tpu.memory_space<vmem>>, vector<1x1x128xf32>
    tpu.vector_store %arg6[%c0_15, %c0_16, %c0_17], %17 {strides = array<i32>} : memref<1x1x128xf32, #tpu.memory_space<vmem>>, vector<1x1x128xf32>,
    %19 = arith.truncf %2 : vector<128x128xf32> to vector<128x128xbf16>
    %c0_18 = arith.constant 0 : index
    %c0_19 = arith.constant 0 : index
    %20 = vector.load %arg4[%c0_18, %c0_19] : memref<128x128xbf16, #tpu.memory_space<vmem>>, vector<128x128xbf16>
    tpu.vector_store %arg4[%c0_18, %c0_19], %19 {strides = array<i32>} : memref<128x128xbf16, #tpu.memory_space<vmem>>, vector<128x128xbf16>,
    return
  }
  func.func @transform_0(%arg0: i32, %arg1: i32) -> (i32, i32) {
    %c2_i32 = arith.constant 2 : i32
    %0 = arith.muli %arg0, %c2_i32 : i32
    %1 = arith.addi %0, %arg1 : i32
    %c0_i32 = arith.constant 0 : i32
    %c0_i32_0 = arith.constant 0 : i32
    return %1, %c0_i32 : i32, i32
  }
  func.func @transform_1(%arg0: i32, %arg1: i32) -> (i32, i32) {
    %c0_i32 = arith.constant 0 : i32
    %c0_i32_0 = arith.constant 0 : i32
    %c0_i32_1 = arith.constant 0 : i32
    return %c0_i32, %c0_i32_0 : i32, i32
  }
  func.func @transform_2(%arg0: i32, %arg1: i32) -> (i32, i32) {
    %c2_i32 = arith.constant 2 : i32
    %0 = arith.muli %arg0, %c2_i32 : i32
    %1 = arith.addi %0, %arg1 : i32
    %c0_i32 = arith.constant 0 : i32
    %c0_i32_0 = arith.constant 0 : i32
    return %1, %c0_i32 : i32, i32
  }
  func.func @transform_3(%arg0: i32, %arg1: i32) -> (i32, i32, i32) {
    %c0_i32 = arith.constant 0 : i32
    %c0_i32_0 = arith.constant 0 : i32
    %c0_i32_1 = arith.constant 0 : i32
    return %arg0, %c0_i32, %c0_i32_0 : i32, i32, i32
  }
  func.func @transform_4(%arg0: i32, %arg1: i32) -> (i32, i32, i32) {
    %c0_i32 = arith.constant 0 : i32
    %c0_i32_0 = arith.constant 0 : i32
    %c0_i32_1 = arith.constant 0 : i32
    return %arg0, %c0_i32, %c0_i32_0 : i32, i32, i32
  }
}

module attributes {stable_mosaic.version = 11 : i64} {
  func.func @score_kernel(%arg0: i32, %arg1: memref<2x1x128xf32, #tpu.memory_space<vmem>>, %arg2: memref<2x1x128xf32, #tpu.memory_space<vmem>>, %arg3: memref<2x128xf32, #tpu.memory_space<vmem>>, %arg4: memref<8x384xf32, #tpu.memory_space<vmem>>, %arg5: memref<128x1xi32, #tpu.memory_space<vmem>>, %arg6: memref<128x128xbf16, #tpu.memory_space<vmem>>, %arg7: memref<128x128xbf16, #tpu.memory_space<vmem>>, %arg8: memref<128x128xf32, #tpu.memory_space<vmem>>, %arg9: memref<128x128xf32, #tpu.memory_space<vmem>>, %arg10: memref<128x1xf32, #tpu.memory_space<vmem>>) attributes {dimension_semantics = [#tpu.dimension_semantics<parallel>], iteration_bounds = array<i64: 2>, scalar_prefetch = 0 : i64, scratch_operands = 0 : i64, tpu.core_type = #tpu.core_type<tc>, window_params = [{pipeline_mode = #tpu.pipeline_mode<synchronous>, transform_indices = @transform_0, window_bounds = array<i64: 2, 1, 128>}, {pipeline_mode = #tpu.pipeline_mode<synchronous>, transform_indices = @transform_1, window_bounds = array<i64: 2, 1, 128>}, {pipeline_mode = #tpu.pipeline_mode<synchronous>, transform_indices = @transform_2, window_bounds = array<i64: 2, 128>}, {pipeline_mode = #tpu.pipeline_mode<synchronous>, transform_indices = @transform_3, window_bounds = array<i64: 8, 384>}, {transform_indices = @transform_4, window_bounds = array<i64: 128, 1>}, {transform_indices = @transform_5, window_bounds = array<i64: 128, 128>}, {transform_indices = @transform_6, window_bounds = array<i64: 128, 128>}, {transform_indices = @transform_7, window_bounds = array<i64: 128, 128>}, {transform_indices = @transform_8, window_bounds = array<i64: 128, 128>}, {transform_indices = @transform_9, window_bounds = array<i64: 128, 1>}]} {
    %c0 = arith.constant 0 : index
    %c0_0 = arith.constant 0 : index
    %c0_1 = arith.constant 0 : index
    %0 = vector.load %arg1[%c0, %c0_0, %c0_1] : memref<2x1x128xf32, #tpu.memory_space<vmem>>, vector<2x1x128xf32>
    %cst = arith.constant 3.906250e-03 : f32
    %1 = vector.broadcast %cst : f32 to vector<2x1x128xf32>
    %2 = arith.mulf %0, %1 : vector<2x1x128xf32>
    %c0_2 = arith.constant 0 : index
    %c0_3 = arith.constant 0 : index
    %c0_4 = arith.constant 0 : index
    %3 = vector.load %arg2[%c0_2, %c0_3, %c0_4] : memref<2x1x128xf32, #tpu.memory_space<vmem>>, vector<2x1x128xf32>
    %cst_5 = arith.constant 3.906250e-03 : f32
    %4 = vector.broadcast %cst_5 : f32 to vector<2x1x128xf32>
    %5 = arith.mulf %3, %4 : vector<2x1x128xf32>
    %6 = arith.mulf %2, %2 : vector<2x1x128xf32>
    %7 = arith.subf %5, %6 : vector<2x1x128xf32>
    %cst_6 = arith.constant 0.000000e+00 : f32
    %8 = vector.broadcast %cst_6 : f32 to vector<2x1x128xf32>
    %9 = arith.maximumf %7, %8 : vector<2x1x128xf32>
    %c0_7 = arith.constant 0 : index
    %c0_8 = arith.constant 0 : index
    %10 = vector.load %arg3[%c0_7, %c0_8] : memref<2x128xf32, #tpu.memory_space<vmem>>, vector<1x128xf32>
    %11 = vector.shape_cast %10 : vector<1x128xf32> to vector<1x1x128xf32>
    %c1 = arith.constant 1 : index
    %c0_9 = arith.constant 0 : index
    %12 = vector.load %arg3[%c1, %c0_9] : memref<2x128xf32, #tpu.memory_space<vmem>>, vector<1x128xf32>
    %13 = vector.shape_cast %12 : vector<1x128xf32> to vector<1x1x128xf32>
    %cst_10 = arith.constant 9.99999974E-6 : f32
    %14 = vector.broadcast %cst_10 : f32 to vector<2x1x128xf32>
    %15 = arith.addf %9, %14 : vector<2x1x128xf32>
    %16 = math.rsqrt %15 : vector<2x1x128xf32>
    %17 = vector.broadcast %11 : vector<1x1x128xf32> to vector<2x1x128xf32>
    %18 = arith.mulf %16, %17 : vector<2x1x128xf32>
    %19 = arith.mulf %2, %18 : vector<2x1x128xf32>
    %20 = vector.broadcast %13 : vector<1x1x128xf32> to vector<2x1x128xf32>
    %21 = arith.subf %20, %19 : vector<2x1x128xf32>
    %22 = vector.extract_strided_slice %18 {offsets = [0, 0, 0], sizes = [1, 1, 128], strides = [1, 1, 1]} : vector<2x1x128xf32> to vector<1x1x128xf32>
    %23 = vector.shape_cast %22 : vector<1x1x128xf32> to vector<1x128xf32>
    %24 = vector.extract_strided_slice %18 {offsets = [1, 0, 0], sizes = [1, 1, 128], strides = [1, 1, 1]} : vector<2x1x128xf32> to vector<1x1x128xf32>
    %25 = vector.shape_cast %24 : vector<1x1x128xf32> to vector<1x128xf32>
    %26 = vector.extract_strided_slice %21 {offsets = [0, 0, 0], sizes = [1, 1, 128], strides = [1, 1, 1]} : vector<2x1x128xf32> to vector<1x1x128xf32>
    %27 = vector.shape_cast %26 : vector<1x1x128xf32> to vector<1x128xf32>
    %28 = vector.extract_strided_slice %21 {offsets = [1, 0, 0], sizes = [1, 1, 128], strides = [1, 1, 1]} : vector<2x1x128xf32> to vector<1x1x128xf32>
    %29 = vector.shape_cast %28 : vector<1x1x128xf32> to vector<1x128xf32>
    %30 = tpu.iota {dimensions = array<i32: 1>} : vector<128x8xi32>
    %c0_11 = arith.constant 0 : index
    %c0_12 = arith.constant 0 : index
    %31 = vector.load %arg5[%c0_11, %c0_12] : memref<128x1xi32, #tpu.memory_space<vmem>>, vector<128x1xi32>
    %32 = vector.broadcast %31 : vector<128x1xi32> to vector<128x8xi32>
    %33 = arith.cmpi eq, %32, %30 : vector<128x8xi32>
    %cst_13 = arith.constant 1.000000e+00 : f32
    %cst_14 = arith.constant 0.000000e+00 : f32
    %34 = vector.broadcast %cst_13 : f32 to vector<128x8xf32>
    %35 = vector.broadcast %cst_14 : f32 to vector<128x8xf32>
    %36 = arith.select %33, %34, %35 : vector<128x8xi1>, vector<128x8xf32>
    %c0_15 = arith.constant 0 : index
    %c0_16 = arith.constant 0 : index
    %37 = vector.load %arg4[%c0_15, %c0_16] : memref<8x384xf32, #tpu.memory_space<vmem>>, vector<8x384xf32>
    %cst_17 = arith.constant dense<0.000000e+00> : vector<128x384xf32>
    %38 = tpu.matmul %36, %37, %cst_17 {dimension_numbers = #tpu.dot_dimension_numbers<[1], [0], [0], [1], [0, 0, 1, 1], [], []>} : vector<128x8xf32>, vector<8x384xf32>, vector<128x384xf32> -> vector<128x384xf32>
    %39 = vector.extract_strided_slice %38 {offsets = [0, 0], sizes = [128, 128], strides = [1, 1]} : vector<128x384xf32> to vector<128x128xf32>
    %40 = vector.extract_strided_slice %38 {offsets = [0, 128], sizes = [128, 128], strides = [1, 1]} : vector<128x384xf32> to vector<128x128xf32>
    %41 = vector.extract_strided_slice %38 {offsets = [0, 256], sizes = [128, 128], strides = [1, 1]} : vector<128x384xf32> to vector<128x128xf32>
    %c0_18 = arith.constant 0 : index
    %c0_19 = arith.constant 0 : index
    %42 = vector.load %arg6[%c0_18, %c0_19] : memref<128x128xbf16, #tpu.memory_space<vmem>>, vector<128x128xbf16>
    %43 = arith.extf %42 : vector<128x128xbf16> to vector<128x128xf32>
    %44 = vector.broadcast %23 : vector<1x128xf32> to vector<128x128xf32>
    %45 = arith.mulf %43, %44 : vector<128x128xf32>
    %46 = vector.broadcast %27 : vector<1x128xf32> to vector<128x128xf32>
    %47 = arith.addf %45, %46 : vector<128x128xf32>
    %c0_20 = arith.constant 0 : index
    %c0_21 = arith.constant 0 : index
    %48 = vector.load %arg7[%c0_20, %c0_21] : memref<128x128xbf16, #tpu.memory_space<vmem>>, vector<128x128xbf16>
    %49 = arith.extf %48 : vector<128x128xbf16> to vector<128x128xf32>
    %50 = vector.broadcast %25 : vector<1x128xf32> to vector<128x128xf32>
    %51 = arith.mulf %49, %50 : vector<128x128xf32>
    %52 = vector.broadcast %29 : vector<1x128xf32> to vector<128x128xf32>
    %53 = arith.addf %51, %52 : vector<128x128xf32>
    %54 = arith.mulf %47, %40 : vector<128x128xf32>
    %cst_22 = arith.constant dense<0.000000e+00> : vector<128xf32>
    %55 = vector.multi_reduction <add>, %54, %cst_22 [1] : vector<128x128xf32> to vector<128xf32>
    %56 = vector.shape_cast %55 : vector<128xf32> to vector<128x1xf32>
    %57 = arith.mulf %53, %41 : vector<128x128xf32>
    %cst_23 = arith.constant dense<0.000000e+00> : vector<128xf32>
    %58 = vector.multi_reduction <add>, %57, %cst_23 [1] : vector<128x128xf32> to vector<128xf32>
    %59 = vector.shape_cast %58 : vector<128xf32> to vector<128x1xf32>
    %c0_24 = arith.constant 0 : index
    %c0_25 = arith.constant 0 : index
    %60 = vector.load %arg8[%c0_24, %c0_25] : memref<128x128xf32, #tpu.memory_space<vmem>>, vector<128x128xf32>
    %61 = arith.mulf %60, %39 : vector<128x128xf32>
    %c0_26 = arith.constant 0 : index
    %c0_27 = arith.constant 0 : index
    %62 = vector.load %arg9[%c0_26, %c0_27] : memref<128x128xf32, #tpu.memory_space<vmem>>, vector<128x128xf32>
    %63 = arith.mulf %61, %62 : vector<128x128xf32>
    %cst_28 = arith.constant dense<0.000000e+00> : vector<128xf32>
    %64 = vector.multi_reduction <add>, %63, %cst_28 [1] : vector<128x128xf32> to vector<128xf32>
    %65 = vector.shape_cast %64 : vector<128xf32> to vector<128x1xf32>
    %cst_29 = arith.constant 1.000000e+00 : f32
    %66 = vector.broadcast %cst_29 : f32 to vector<128x1xf32>
    %67 = arith.mulf %66, %65 : vector<128x1xf32>
    %68 = arith.negf %67 : vector<128x1xf32>
    %69 = math.exp %68 : vector<128x1xf32>
    %cst_30 = arith.constant 1.000000e+00 : f32
    %70 = vector.broadcast %cst_30 : f32 to vector<128x1xf32>
    %71 = arith.addf %70, %69 : vector<128x1xf32>
    %72 = arith.divf %70, %71 : vector<128x1xf32>
    %cst_31 = arith.constant 2.000000e+01 : f32
    %73 = vector.broadcast %cst_31 : f32 to vector<128x1xf32>
    %74 = arith.mulf %73, %72 : vector<128x1xf32>
    %cst_32 = arith.constant 1.000000e+00 : f32
    %75 = vector.broadcast %cst_32 : f32 to vector<128x1xf32>
    %76 = arith.mulf %75, %56 : vector<128x1xf32>
    %77 = arith.negf %76 : vector<128x1xf32>
    %78 = math.exp %77 : vector<128x1xf32>
    %cst_33 = arith.constant 1.000000e+00 : f32
    %79 = vector.broadcast %cst_33 : f32 to vector<128x1xf32>
    %80 = arith.addf %79, %78 : vector<128x1xf32>
    %81 = arith.divf %79, %80 : vector<128x1xf32>
    %82 = arith.mulf %74, %81 : vector<128x1xf32>
    %cst_34 = arith.constant 1.000000e+00 : f32
    %83 = vector.broadcast %cst_34 : f32 to vector<128x1xf32>
    %84 = arith.mulf %83, %59 : vector<128x1xf32>
    %85 = arith.negf %84 : vector<128x1xf32>
    %86 = math.exp %85 : vector<128x1xf32>
    %cst_35 = arith.constant 1.000000e+00 : f32
    %87 = vector.broadcast %cst_35 : f32 to vector<128x1xf32>
    %88 = arith.addf %87, %86 : vector<128x1xf32>
    %89 = arith.divf %87, %88 : vector<128x1xf32>
    %90 = arith.mulf %82, %89 : vector<128x1xf32>
    %c0_36 = arith.constant 0 : index
    %c0_37 = arith.constant 0 : index
    %91 = vector.load %arg10[%c0_36, %c0_37] : memref<128x1xf32, #tpu.memory_space<vmem>>, vector<128x1xf32>
    tpu.vector_store %arg10[%c0_36, %c0_37], %90 {strides = array<i32>} : memref<128x1xf32, #tpu.memory_space<vmem>>, vector<128x1xf32>,
    return
  }
  func.func @transform_0(%arg0: i32) -> (i32, i32, i32) {
    %c0_i32 = arith.constant 0 : i32
    %c0_i32_0 = arith.constant 0 : i32
    %c0_i32_1 = arith.constant 0 : i32
    %c0_i32_2 = arith.constant 0 : i32
    return %c0_i32, %c0_i32_0, %c0_i32_1 : i32, i32, i32
  }
  func.func @transform_1(%arg0: i32) -> (i32, i32, i32) {
    %c0_i32 = arith.constant 0 : i32
    %c0_i32_0 = arith.constant 0 : i32
    %c0_i32_1 = arith.constant 0 : i32
    %c0_i32_2 = arith.constant 0 : i32
    return %c0_i32, %c0_i32_0, %c0_i32_1 : i32, i32, i32
  }
  func.func @transform_2(%arg0: i32) -> (i32, i32) {
    %c0_i32 = arith.constant 0 : i32
    %c0_i32_0 = arith.constant 0 : i32
    %c0_i32_1 = arith.constant 0 : i32
    return %c0_i32, %c0_i32_0 : i32, i32
  }
  func.func @transform_3(%arg0: i32) -> (i32, i32) {
    %c0_i32 = arith.constant 0 : i32
    %c0_i32_0 = arith.constant 0 : i32
    %c0_i32_1 = arith.constant 0 : i32
    return %c0_i32, %c0_i32_0 : i32, i32
  }
  func.func @transform_4(%arg0: i32) -> (i32, i32) {
    %c0_i32 = arith.constant 0 : i32
    %c0_i32_0 = arith.constant 0 : i32
    return %arg0, %c0_i32 : i32, i32
  }
  func.func @transform_5(%arg0: i32) -> (i32, i32) {
    %c0_i32 = arith.constant 0 : i32
    %c0_i32_0 = arith.constant 0 : i32
    return %arg0, %c0_i32 : i32, i32
  }
  func.func @transform_6(%arg0: i32) -> (i32, i32) {
    %c2_i32 = arith.constant 2 : i32
    %0 = arith.addi %arg0, %c2_i32 : i32
    %c0_i32 = arith.constant 0 : i32
    %c0_i32_0 = arith.constant 0 : i32
    return %0, %c0_i32 : i32, i32
  }
  func.func @transform_7(%arg0: i32) -> (i32, i32) {
    %c0_i32 = arith.constant 0 : i32
    %c0_i32_0 = arith.constant 0 : i32
    return %arg0, %c0_i32 : i32, i32
  }
  func.func @transform_8(%arg0: i32) -> (i32, i32) {
    %c0_i32 = arith.constant 0 : i32
    %c0_i32_0 = arith.constant 0 : i32
    return %arg0, %c0_i32 : i32, i32
  }
  func.func @transform_9(%arg0: i32) -> (i32, i32) {
    %c0_i32 = arith.constant 0 : i32
    %c0_i32_0 = arith.constant 0 : i32
    return %arg0, %c0_i32 : i32, i32
  }
}

</mosaic_0001>

<llo_original>
// kernel: only_image_forward.2
$region0: #{only_image_forward.2}
  #allocation0 [shape = 'u32[]', space=smem, size = 0x4, offset = 0x4, fixed_abs, tag = 'smem constant byte address 0x4 - core index']
  #allocation1 [shape = 'u32[144,128]{1,0:T(1,128)}', space=vmem, size = 0x12000, scoped, tag = 'internal scratch']
  %s0 = inlined_call_operand.vmem [shape: bf16[512,256], index: 0, kind: input, shape index: {}]
  %s1 = inlined_call_operand.vmem [shape: bf16[256,128], index: 1, kind: input, shape index: {}]
  %s2 = inlined_call_operand.vmem [shape: bf16[512,128], index: 2, kind: output, shape index: {0}]
  %s3 = inlined_call_operand.vmem [shape: f32[2,1,128], index: 3, kind: output, shape index: {1}]
  %s4 = inlined_call_operand.vmem [shape: f32[2,1,128], index: 4, kind: output, shape index: {2}]
  %5 = xla_tuple %s2, %s3, %s4
  %s6 = sld [smem:[#allocation0]]
  $region61: #{only_image_forward.2} parent=0
    _
  %s8 = ssub.s32 1, %s6
  %s9 = scalar_select 0, %s8, %s6
  loop: start=0, step=1, limit=6
  $region2: #{only_image_forward.2} parent=0 // loop_pre_header
    _
  $region3: #{only_image_forward.2} parent=0 // loop_header
    %s11 = sphi 0, %s15
    %p12 = scmp.ge.s32.totalorder %s11, 6
    %s18 = sphi 0, %s30
    %s19 = sphi 0, %s26
    %s20 = sphi 0, %s18
    %s21 = sphi 0, %s19
    %s22 = sphi 0, %s20
    %s23 = sphi 0, %s21
    %s37 = sphi 0, %s39
    %s40 = sphi 0, %s37
    %s41 = sphi 0, %s40
    %s57 = sphi 0, %s41
    %s61 = sphi 0, %s61
    %s63 = sphi 0, %s61
    %s64 = sphi 0, %s63
    %s78 = sphi 0, %s64
    %s88 = sphi 0, %s90
    %s91 = sphi 0, %s88
    %s92 = sphi 0, %s91
    %s108 = sphi 0, %s92
    %s114 = sphi 0, %s116
    %s117 = sphi 0, %s114
    %s118 = sphi 0, %s117
    %s134 = sphi 0, %s118
    %s140 = sphi 0, %s142
    %s143 = sphi 0, %s140
    %s144 = sphi 0, %s143
    %s160 = sphi 0, %s144
  $region4: #{only_image_forward.2} parent=0 // loop_header_branch
    %14 = sbr.rel (%p12) target = $region8
  $region5: #{only_image_forward.2} parent=0 // loop_body
    %s16 = ssub.s32 %s11, 1
    %s17 = ssub.s32 %s11, 2
    %s24 = sadd.s32 1, %s19
    %p25 = scmp.ge.s32.totalorder %s24, 2
    %s26 = scalar_select %p25, 0, %s24
    %s27 = sadd.s32 1, %s18
    %s28 = scalar_select %p25, %s27, %s18
    %p29 = scmp.ge.s32.totalorder %s28, 2
    %s30 = scalar_select %p29, 0, %s28
    %s31 = smul.u32 %s18, 2
    %s32 = sadd.s32 %s31, %s19
    %s33 = smul.u32 %s30, 2
    %s34 = sadd.s32 %s33, %s26
    %s35 = ssub.s32 %s32, %s34
    %p36 = scmp.eq.s32.totalorder %s35, 0
    %s38 = sadd.s32 %s37, 1
    %s39 = scalar_select %p36, %s37, %s38
    %p42 = pneg %p36
    %p43 = scmp.eq.s32.totalorder %s11, 3
    %p44 = por %p42, %p43
    %p45 = scmp.ne.s32.totalorder %s37, %s40
    %p46 = scmp.eq.s32.totalorder %s11, 0
    %p47 = por %p45, %p46
    %p48 = scmp.ne.s32.totalorder %s37, %s40
    %p49 = scmp.eq.s32.totalorder %s16, 3
    %p50 = por %p48, %p49
    %p51 = scmp.ne.s32.totalorder %s40, %s41
    %p52 = scmp.eq.s32.totalorder %s16, 0
    %p53 = por %p51, %p52
    %p54 = scmp.ne.s32.totalorder %s40, %s41
    %p55 = scmp.eq.s32.totalorder %s17, 3
    %p56 = por %p54, %p55
    %p58 = scmp.ne.s32.totalorder %s41, %s57
    %p59 = scmp.eq.s32.totalorder %s17, 0
    %p60 = por %p58, %p59
    %s62 = sadd.s32 %s61, 1
    %p65 = scmp.eq.s32.totalorder %s11, 3
    %p66 = scmp.ne.s32.totalorder %s61, %s63
    %p67 = scmp.eq.s32.totalorder %s11, 0
    %p68 = por %p66, %p67
    %p69 = scmp.ne.s32.totalorder %s61, %s63
    %p70 = scmp.eq.s32.totalorder %s16, 3
    %p71 = por %p69, %p70
    %p72 = scmp.ne.s32.totalorder %s63, %s64
    %p73 = scmp.eq.s32.totalorder %s16, 0
    %p74 = por %p72, %p73
    %p75 = scmp.ne.s32.totalorder %s63, %s64
    %p76 = scmp.eq.s32.totalorder %s17, 3
    %p77 = por %p75, %p76
    %p79 = scmp.ne.s32.totalorder %s64, %s78
    %p80 = scmp.eq.s32.totalorder %s17, 0
    %p81 = por %p79, %p80
    %s82 = smul.u32 %s18, 2
    %s83 = sadd.s32 %s82, %s19
    %s84 = smul.u32 %s30, 2
    %s85 = sadd.s32 %s84, %s26
    %s86 = ssub.s32 %s83, %s85
    %p87 = scmp.eq.s32.totalorder %s86, 0
    %s89 = sadd.s32 %s88, 1
    %s90 = scalar_select %p87, %s88, %s89
    %p93 = pneg %p87
    %p94 = scmp.eq.s32.totalorder %s11, 3
    %p95 = por %p93, %p94
    %p96 = scmp.ne.s32.totalorder %s88, %s91
    %p97 = scmp.eq.s32.totalorder %s11, 0
    %p98 = por %p96, %p97
    %p99 = scmp.ne.s32.totalorder %s88, %s91
    %p100 = scmp.eq.s32.totalorder %s16, 3
    %p101 = por %p99, %p100
    %p102 = scmp.ne.s32.totalorder %s91, %s92
    %p103 = scmp.eq.s32.totalorder %s16, 0
    %p104 = por %p102, %p103
    %p105 = scmp.ne.s32.totalorder %s91, %s92
    %p106 = scmp.eq.s32.totalorder %s17, 3
    %p107 = por %p105, %p106
    %p109 = scmp.ne.s32.totalorder %s92, %s108
    %p110 = scmp.eq.s32.totalorder %s17, 0
    %p111 = por %p109, %p110
    %s112 = ssub.s32 %s18, %s30
    %p113 = scmp.eq.s32.totalorder %s112, 0
    %s115 = sadd.s32 %s114, 1
    %s116 = scalar_select %p113, %s114, %s115
    %p119 = pneg %p113
    %p120 = scmp.eq.s32.totalorder %s11, 3
    %p121 = por %p119, %p120
    %p122 = scmp.ne.s32.totalorder %s114, %s117
    %p123 = scmp.eq.s32.totalorder %s11, 0
    %p124 = por %p122, %p123
    %p125 = scmp.ne.s32.totalorder %s114, %s117
    %p126 = scmp.eq.s32.totalorder %s16, 3
    %p127 = por %p125, %p126
    %p128 = scmp.ne.s32.totalorder %s117, %s118
    %p129 = scmp.eq.s32.totalorder %s16, 0
    %p130 = por %p128, %p129
    %p131 = scmp.ne.s32.totalorder %s117, %s118
    %p132 = scmp.eq.s32.totalorder %s17, 3
    %p133 = por %p131, %p132
    %p135 = scmp.ne.s32.totalorder %s118, %s134
    %p136 = scmp.eq.s32.totalorder %s17, 0
    %p137 = por %p135, %p136
    %s138 = ssub.s32 %s18, %s30
    %p139 = scmp.eq.s32.totalorder %s138, 0
    %s141 = sadd.s32 %s140, 1
    %s142 = scalar_select %p139, %s140, %s141
    %p145 = pneg %p139
    %p146 = scmp.eq.s32.totalorder %s11, 3
    %p147 = por %p145, %p146
    %p148 = scmp.ne.s32.totalorder %s140, %s143
    %p149 = scmp.eq.s32.totalorder %s11, 0
    %p150 = por %p148, %p149
    %p151 = scmp.ne.s32.totalorder %s140, %s143
    %p152 = scmp.eq.s32.totalorder %s16, 3
    %p153 = por %p151, %p152
    %p154 = scmp.ne.s32.totalorder %s143, %s144
    %p155 = scmp.eq.s32.totalorder %s16, 0
    %p156 = por %p154, %p155
    %p157 = scmp.ne.s32.totalorder %s143, %s144
    %p158 = scmp.eq.s32.totalorder %s17, 3
    %p159 = por %p157, %p158
    %p161 = scmp.ne.s32.totalorder %s144, %s160
    %p162 = scmp.eq.s32.totalorder %s17, 0
    %p163 = por %p161, %p162
    %p164 = scmp.le.s32.totalorder 1, %s11
    %p165 = scmp.lt.s32.totalorder %s11, 5
    %p166 = pnand %p164, %p165
    %p167 = pneg %p166
    // Predicated region
    $region9: #{only_image_forward.2} parent=5 // pred_check
      _
    $region10: #{only_image_forward.2} parent=5 // pred_check_branch
      %169 = sbr.rel (%p166) target = $region12
    $region11: #{only_image_forward.2} parent=5 // pred_region
      %s170 = ssub.s32 %s11, 1
      // Predicated region
      $region13: #{only_image_forward.2} parent=11 // pred_check
        %p171 = pneg %p74
      $region14: #{only_image_forward.2} parent=11 // pred_check_branch
        %173 = sbr.rel (%p171) target = $region16
      $region15: #{only_image_forward.2} parent=11 // pred_region
        _
      $region16: #{only_image_forward.2} parent=11 // pred_fallthru
        _
    $region12: #{only_image_forward.2} parent=5 // pred_fallthru
      _
    %p174 = scmp.lt.s32.totalorder %s11, 4
    // Predicated region
    $region17: #{only_image_forward.2} parent=5 // pred_check
      %p175 = pneg %p174
    $region18: #{only_image_forward.2} parent=5 // pred_check_branch
      %177 = sbr.rel (%p175) target = $region20
    $region19: #{only_image_forward.2} parent=5 // pred_region
      // Predicated region
      $region21: #{only_image_forward.2} parent=19 // pred_check
        %p178 = pneg %p47
      $region22: #{only_image_forward.2} parent=19 // pred_check_branch
        %180 = sbr.rel (%p178) target = $region24
      $region23: #{only_image_forward.2} parent=19 // pred_region
        %s181 = smul.u32 %s18, 2
        %s182 = sadd.s32 %s181, %s19
        %s183 = smul.u32 16, %s182
        %p184 = scmp.lt.s32.totalorder %s183, 63
        %s185 = scalar_select %p184, %s183, 63
        %s186 = smul.addr %s185, 2
        %s187 = smul.addr %s186, 4
        %s188 = scalar_lea.vmem %s0, %s187
        %s189 = smul.u32 %s18, 2
        %s190 = sadd.s32 %s189, %s19
        %s191 = smul.u32 16, %s190
      $region24: #{only_image_forward.2} parent=19 // pred_fallthru
        _
    $region20: #{only_image_forward.2} parent=5 // pred_fallthru
      _
    %p192 = scmp.le.s32.totalorder 1, %s11
    %p193 = scmp.lt.s32.totalorder %s11, 5
    %p194 = pnand %p192, %p193
    %p195 = pneg %p194
    // Predicated region
    $region25: #{only_image_forward.2} parent=5 // pred_check
      _
    $region26: #{only_image_forward.2} parent=5 // pred_check_branch
      %197 = sbr.rel (%p194) target = $region28
    $region27: #{only_image_forward.2} parent=5 // pred_region
      %s198 = ssub.s32 %s11, 1
      %s199 = smul.u32 %s20, 2
      %s200 = sadd.s32 %s199, %s21
      %s201 = smul.u32 16, %s200
      %p202 = scmp.lt.s32.totalorder %s201, 63
      %s203 = scalar_select %p202, %s201, 63
      %s204 = smul.addr %s203, 2
      %s205 = smul.addr %s204, 4
      %s206 = scalar_lea.vmem %s0, %s205
      %p207 = pneg %p53
      %p208 = pneg %p50
      %p209 = pneg %p74
      %p210 = pneg %p71
      %p211 = pneg %p104
      %p212 = pneg %p101
      %s213 = smul.u32 %s20, 2
      %s214 = sadd.s32 %s213, %s21
      %s215 = smul.u32 16, %s214
      %p216 = scmp.lt.s32.totalorder %s215, 63
      %s217 = scalar_select %p216, %s215, 63
      %s218 = smul.addr %s217, 4
      %s219 = scalar_lea.vmem %s2, %s218
      %p220 = pneg %p130
      %p221 = pneg %p127
      %p222 = scmp.lt.s32.totalorder %s20, 1
      %s223 = scalar_select %p222, %s20, 1
      %s224 = scalar_lea.vmem %s3, %s223
      %p225 = pneg %p156
      %p226 = pneg %p153
      %p227 = scmp.lt.s32.totalorder %s20, 1
      %s228 = scalar_select %p227, %s20, 1
      %s229 = scalar_lea.vmem %s4, %s228
      %s230 = smul.u32 %s20, 2
      %s231 = sadd.s32 %s230, %s21
      %s232 = smul.u32 16, %s231
      %p233 = scmp.lt.s32.totalorder %s232, 63
      %s234 = scalar_select %p233, %s232, 63
      %s235 = smul.addr %s234, 2
      %s236 = smul.addr %s235, 4
      %s237 = scalar_lea.vmem %s0, %s236
      %s238 = smul.u32 %s20, 2
      %s239 = sadd.s32 %s238, %s21
      %s240 = smul.u32 16, %s239
      %s241 = smul.u32 %s20, 2
      %s242 = sadd.s32 %s241, %s21
      %s243 = smul.u32 16, %s242
      %p244 = scmp.lt.s32.totalorder %s243, 63
      %s245 = scalar_select %p244, %s243, 63
      %s246 = smul.addr %s245, 4
      %s247 = scalar_lea.vmem %s2, %s246
      %s248 = smul.u32 %s20, 2
      %s249 = sadd.s32 %s248, %s21
      %s250 = smul.u32 16, %s249
      %p251 = scmp.lt.s32.totalorder %s20, 1
      %s252 = scalar_select %p251, %s20, 1
      %s253 = scalar_lea.vmem %s3, %s252
      %p254 = scmp.lt.s32.totalorder %s20, 1
      %s255 = scalar_select %p254, %s20, 1
      %s256 = scalar_lea.vmem %s4, %s255
      %v258 = vld [vmem:[%s237] sm:$0xff]
      %v259 = vld [vmem:[%s237 + $0x8] sm:$0xff]
      %v260 = vld [vmem:[%s237 + $0x10] sm:$0xff]
      %v261 = vld [vmem:[%s237 + $0x18] sm:$0xff]
      %v262 = vld [vmem:[%s237 + $0x20] sm:$0xff]
      %v263 = vld [vmem:[%s237 + $0x28] sm:$0xff]
      %v264 = vld [vmem:[%s237 + $0x30] sm:$0xff]
      %v265 = vld [vmem:[%s237 + $0x38] sm:$0xff]
      %v266 = vld [vmem:[%s237 + $0x40] sm:$0xff]
      %v267 = vld [vmem:[%s237 + $0x48] sm:$0xff]
      %v268 = vld [vmem:[%s237 + $0x50] sm:$0xff]
      %v269 = vld [vmem:[%s237 + $0x58] sm:$0xff]
      %v270 = vld [vmem:[%s237 + $0x60] sm:$0xff]
      %v271 = vld [vmem:[%s237 + $0x68] sm:$0xff]
      %v272 = vld [vmem:[%s237 + $0x70] sm:$0xff]
      %v273 = vld [vmem:[%s237 + $0x78] sm:$0xff]
      %v274 = vld [vmem:[%s1] sm:$0xf]
      %v275 = vld [vmem:[%s1 + $0x4] sm:$0xf]
      %v276 = vld [vmem:[%s1 + $0x8] sm:$0xf]
      %v277 = vld [vmem:[%s1 + $0xc] sm:$0xf]
      %v278 = vld [vmem:[%s1 + $0x10] sm:$0xf]
      %v279 = vld [vmem:[%s1 + $0x14] sm:$0xf]
      %v280 = vld [vmem:[%s1 + $0x18] sm:$0xf]
      %v281 = vld [vmem:[%s1 + $0x1c] sm:$0xf]
      %v282 = vld [vmem:[%s1 + $0x20] sm:$0xf]
      %v283 = vld [vmem:[%s1 + $0x24] sm:$0xf]
      %v284 = vld [vmem:[%s1 + $0x28] sm:$0xf]
      %v285 = vld [vmem:[%s1 + $0x2c] sm:$0xf]
      %v286 = vld [vmem:[%s1 + $0x30] sm:$0xf]
      %v287 = vld [vmem:[%s1 + $0x34] sm:$0xf]
      %v288 = vld [vmem:[%s1 + $0x38] sm:$0xf]
      %v289 = vld [vmem:[%s1 + $0x3c] sm:$0xf]
      %v290 = vld [vmem:[%s1 + $0x40] sm:$0xf]
      %v291 = vld [vmem:[%s1 + $0x44] sm:$0xf]
      %v292 = vld [vmem:[%s1 + $0x48] sm:$0xf]
      %v293 = vld [vmem:[%s1 + $0x4c] sm:$0xf]
      %v294 = vld [vmem:[%s1 + $0x50] sm:$0xf]
      %v295 = vld [vmem:[%s1 + $0x54] sm:$0xf]
      %v296 = vld [vmem:[%s1 + $0x58] sm:$0xf]
      %v297 = vld [vmem:[%s1 + $0x5c] sm:$0xf]
      %v298 = vld [vmem:[%s1 + $0x60] sm:$0xf]
      %v299 = vld [vmem:[%s1 + $0x64] sm:$0xf]
      %v300 = vld [vmem:[%s1 + $0x68] sm:$0xf]
      %v301 = vld [vmem:[%s1 + $0x6c] sm:$0xf]
      %v302 = vld [vmem:[%s1 + $0x70] sm:$0xf]
      %v303 = vld [vmem:[%s1 + $0x74] sm:$0xf]
      %v304 = vld [vmem:[%s1 + $0x78] sm:$0xf]
      %v305 = vld [vmem:[%s1 + $0x7c] sm:$0xf]
      %v322 = vunpack.c.l.b16 %v258
      %v323 = vunpack.c.h.b16 %v258
      %v324 = vunpack.c.l.b16 %v259
      %v325 = vunpack.c.h.b16 %v259
      %v326 = vunpack.c.l.b16 %v260
      %v327 = vunpack.c.h.b16 %v260
      %v328 = vunpack.c.l.b16 %v261
      %v329 = vunpack.c.h.b16 %v261
      %v330 = vunpack.c.l.b16 %v262
      %v331 = vunpack.c.h.b16 %v262
      %v332 = vunpack.c.l.b16 %v263
      %v333 = vunpack.c.h.b16 %v263
      %v334 = vunpack.c.l.b16 %v264
      %v335 = vunpack.c.h.b16 %v264
      %v336 = vunpack.c.l.b16 %v265
      %v337 = vunpack.c.h.b16 %v265
      %v338 = vunpack.c.l.b16 %v266
      %v339 = vunpack.c.h.b16 %v266
      %v340 = vunpack.c.l.b16 %v267
      %v341 = vunpack.c.h.b16 %v267
      %v342 = vunpack.c.l.b16 %v268
      %v343 = vunpack.c.h.b16 %v268
      %v344 = vunpack.c.l.b16 %v269
      %v345 = vunpack.c.h.b16 %v269
      %v346 = vunpack.c.l.b16 %v270
      %v347 = vunpack.c.h.b16 %v270
      %v348 = vunpack.c.l.b16 %v271
      %v349 = vunpack.c.h.b16 %v271
      %v350 = vunpack.c.l.b16 %v272
      %v351 = vunpack.c.h.b16 %v272
      %v352 = vunpack.c.l.b16 %v273
      %v353 = vunpack.c.h.b16 %v273
      %v354 = vpack.c.b16 %v324, %v322
      %v355 = vpack.c.b16 %v325, %v323
      %v356 = vpack.c.b16 %v328, %v326
      %v357 = vpack.c.b16 %v329, %v327
      %v358 = vpack.c.b16 %v332, %v330
      %v359 = vpack.c.b16 %v333, %v331
      %v360 = vpack.c.b16 %v336, %v334
      %v361 = vpack.c.b16 %v337, %v335
      %v362 = vpack.c.b16 %v340, %v338
      %v363 = vpack.c.b16 %v341, %v339
      %v364 = vpack.c.b16 %v344, %v342
      %v365 = vpack.c.b16 %v345, %v343
      %v366 = vpack.c.b16 %v348, %v346
      %v367 = vpack.c.b16 %v349, %v347
      %v368 = vpack.c.b16 %v352, %v350
      %v369 = vpack.c.b16 %v353, %v351
      %v418 = vunpack.c.l.b16 %v274
      %v419 = vunpack.c.l.b16 %v275
      %v420 = vunpack.c.l.b16 %v276
      %v421 = vunpack.c.l.b16 %v277
      %v422 = vunpack.c.l.b16 %v278
      %v423 = vunpack.c.l.b16 %v279
      %v424 = vunpack.c.l.b16 %v280
      %v425 = vunpack.c.l.b16 %v281
      %v426 = vunpack.c.l.b16 %v282
      %v427 = vunpack.c.l.b16 %v283
      %v428 = vunpack.c.l.b16 %v284
      %v429 = vunpack.c.l.b16 %v285
      %v430 = vunpack.c.l.b16 %v286
      %v431 = vunpack.c.l.b16 %v287
      %v432 = vunpack.c.l.b16 %v288
      %v433 = vunpack.c.l.b16 %v289
      %v434 = vunpack.c.l.b16 %v290
      %v435 = vunpack.c.l.b16 %v291
      %v436 = vunpack.c.l.b16 %v292
      %v437 = vunpack.c.l.b16 %v293
      %v438 = vunpack.c.l.b16 %v294
      %v439 = vunpack.c.l.b16 %v295
      %v440 = vunpack.c.l.b16 %v296
      %v441 = vunpack.c.l.b16 %v297
      %v442 = vunpack.c.l.b16 %v298
      %v443 = vunpack.c.l.b16 %v299
      %v444 = vunpack.c.l.b16 %v300
      %v445 = vunpack.c.l.b16 %v301
      %v446 = vunpack.c.l.b16 %v302
      %v447 = vunpack.c.l.b16 %v303
      %v448 = vunpack.c.l.b16 %v304
      %v449 = vunpack.c.l.b16 %v305
      %v450 = vpack.c.b16 %v419, %v418
      %v451 = vpack.c.b16 %v421, %v420
      %v452 = vpack.c.b16 %v423, %v422
      %v453 = vpack.c.b16 %v425, %v424
      %v454 = vpack.c.b16 %v427, %v426
      %v455 = vpack.c.b16 %v429, %v428
      %v456 = vpack.c.b16 %v431, %v430
      %v457 = vpack.c.b16 %v433, %v432
      %v458 = vpack.c.b16 %v435, %v434
      %v459 = vpack.c.b16 %v437, %v436
      %v460 = vpack.c.b16 %v439, %v438
      %v461 = vpack.c.b16 %v441, %v440
      %v462 = vpack.c.b16 %v443, %v442
      %v463 = vpack.c.b16 %v445, %v444
      %v464 = vpack.c.b16 %v447, %v446
      %v465 = vpack.c.b16 %v449, %v448
      %482 = vmatprep.subr.bf16.mxu0 0
      %483 = vmatpush1.bf16.msra.mxu0 %v450
      %484 = vmatprep.subr.bf16.mxu0 0
      %485 = vmatpush1.bf16.msra.mxu0 %v451
      %486 = vmatprep.subr.bf16.mxu0 0
      %487 = vmatpush1.bf16.msra.mxu0 %v452
      %488 = vmatprep.subr.bf16.mxu0 0
      %489 = vmatpush1.bf16.msra.mxu0 %v453
      %490 = vmatprep.subr.bf16.mxu0 0
      %491 = vmatpush1.bf16.msra.mxu0 %v454
      %492 = vmatprep.subr.bf16.mxu0 0
      %493 = vmatpush1.bf16.msra.mxu0 %v455
      %494 = vmatprep.subr.bf16.mxu0 0
      %495 = vmatpush1.bf16.msra.mxu0 %v456
      %496 = vmatprep.subr.bf16.mxu0 0
      %497 = vmatpush1.bf16.msra.mxu0 %v457
      %498 = vmatprep.subr.bf16.mxu0 0
      %499 = vmatpush1.bf16.msra.mxu0 %v458
      %500 = vmatprep.subr.bf16.mxu0 0
      %501 = vmatpush1.bf16.msra.mxu0 %v459
      %502 = vmatprep.subr.bf16.mxu0 0
      %503 = vmatpush1.bf16.msra.mxu0 %v460
      %504 = vmatprep.subr.bf16.mxu0 0
      %505 = vmatpush1.bf16.msra.mxu0 %v461
      %506 = vmatprep.subr.bf16.mxu0 0
      %507 = vmatpush1.bf16.msra.mxu0 %v462
      %508 = vmatprep.subr.bf16.mxu0 0
      %509 = vmatpush1.bf16.msra.mxu0 %v463
      %510 = vmatprep.subr.bf16.mxu0 0
      %511 = vmatpush1.bf16.msra.mxu0 %v464
      %512 = vmatprep.subr.bf16.mxu0 0
      %513 = vmatpush1.bf16.msra.mxu0 %v465
      %514 = vmatprep.mubr.bf16.mxu0 %v355
      %515 = vmatmul.mubr.bf16.gmra.mrb[0].mxu0 %v354
      %v516 = vpop.f32.mrb[0].mxu0
      %v517 = vadd.f32 0.0, %v516
      %v518 = vpop.f32.mrb[0].mxu0
      %v519 = vpop.f32.mrb[0].mxu0
      %v520 = vadd.f32 0.0, %v519
      %v521 = vpop.f32.mrb[0].mxu0
      %522 = vmatprep.mubr.bf16.mxu0 %v357
      %523 = vmatmul.mubr.bf16.gmra.mrb[0].mxu0 %v356
      %v524 = vpop.f32.mrb[0].mxu0
      %v525 = vadd.f32 0.0, %v524
      %v526 = vpop.f32.mrb[0].mxu0
      %v527 = vpop.f32.mrb[0].mxu0
      %v528 = vadd.f32 0.0, %v527
      %v529 = vpop.f32.mrb[0].mxu0
      %530 = vmatprep.mubr.bf16.mxu0 %v359
      %531 = vmatmul.mubr.bf16.gmra.mrb[0].mxu0 %v358
      %v532 = vpop.f32.mrb[0].mxu0
      %v533 = vadd.f32 0.0, %v532
      %v534 = vpop.f32.mrb[0].mxu0
      %v535 = vpop.f32.mrb[0].mxu0
      %v536 = vadd.f32 0.0, %v535
      %v537 = vpop.f32.mrb[0].mxu0
      %538 = vmatprep.mubr.bf16.mxu0 %v361
      %539 = vmatmul.mubr.bf16.gmra.mrb[0].mxu0 %v360
      %v540 = vpop.f32.mrb[0].mxu0
      %v541 = vadd.f32 0.0, %v540
      %v542 = vpop.f32.mrb[0].mxu0
      %v543 = vpop.f32.mrb[0].mxu0
      %v544 = vadd.f32 0.0, %v543
      %v545 = vpop.f32.mrb[0].mxu0
      %546 = vmatprep.mubr.bf16.mxu0 %v363
      %547 = vmatmul.mubr.bf16.gmra.mrb[0].mxu0 %v362
      %v548 = vpop.f32.mrb[0].mxu0
      %v549 = vadd.f32 0.0, %v548
      %v550 = vpop.f32.mrb[0].mxu0
      %v551 = vpop.f32.mrb[0].mxu0
      %v552 = vadd.f32 0.0, %v551
      %v553 = vpop.f32.mrb[0].mxu0
      %554 = vmatprep.mubr.bf16.mxu0 %v365
      %555 = vmatmul.mubr.bf16.gmra.mrb[0].mxu0 %v364
      %v556 = vpop.f32.mrb[0].mxu0
      %v557 = vadd.f32 0.0, %v556
      %v558 = vpop.f32.mrb[0].mxu0
      %v559 = vpop.f32.mrb[0].mxu0
      %v560 = vadd.f32 0.0, %v559
      %v561 = vpop.f32.mrb[0].mxu0
      %562 = vmatprep.mubr.bf16.mxu0 %v367
      %563 = vmatmul.mubr.bf16.gmra.mrb[0].mxu0 %v366
      %v564 = vpop.f32.mrb[0].mxu0
      %v565 = vadd.f32 0.0, %v564
      %v566 = vpop.f32.mrb[0].mxu0
      %v567 = vpop.f32.mrb[0].mxu0
      %v568 = vadd.f32 0.0, %v567
      %v569 = vpop.f32.mrb[0].mxu0
      %570 = vmatprep.mubr.bf16.mxu0 %v369
      %571 = vmatmul.mubr.bf16.gmra.mrb[0].mxu0 %v368
      %v572 = vpop.f32.mrb[0].mxu0
      %v573 = vadd.f32 0.0, %v572
      %v574 = vpop.f32.mrb[0].mxu0
      %v575 = vpop.f32.mrb[0].mxu0
      %v576 = vadd.f32 0.0, %v575
      %v577 = vpop.f32.mrb[0].mxu0
      %578 = vdwg.mxu0
      %p579 = scmp.eq.s32.totalorder %s21, 0
      // Predicated region
      $region29: #{only_image_forward.2} parent=27 // pred_check
        %p580 = pneg %p579
      $region30: #{only_image_forward.2} parent=27 // pred_check_branch
        %582 = sbr.rel (%p580) target = $region32
      $region31: #{only_image_forward.2} parent=27 // pred_region
        %583 = vst [vmem:[%s253] sm:$0x1] 0.0
        %584 = vst [vmem:[%s256] sm:$0x1] 0.0
      $region32: #{only_image_forward.2} parent=27 // pred_fallthru
        _
      %v585 = vld [vmem:[%s253] sm:$0x1]
      %v586 = vadd.f32 %v517, %v520
      %v587 = vadd.f32 %v586, %v525
      %v588 = vadd.f32 %v587, %v528
      %v589 = vadd.f32 %v588, %v533
      %v590 = vadd.f32 %v589, %v536
      %v591 = vadd.f32 %v590, %v541
      %v592 = vadd.f32 %v591, %v544
      %v593 = vadd.f32 %v592, %v549
      %v594 = vadd.f32 %v593, %v552
      %v595 = vadd.f32 %v594, %v557
      %v596 = vadd.f32 %v595, %v560
      %v597 = vadd.f32 %v596, %v565
      %v598 = vadd.f32 %v597, %v568
      %v599 = vadd.f32 %v598, %v573
      %v600 = vadd.f32 %v599, %v576
      %v601 = vrot.slane %v600, 4
      %v602 = vadd.f32 %v600, %v601
      %v603 = vrot.slane %v602, 2
      %v604 = vadd.f32 %v602, %v603
      %v605 = vrot.slane %v604, 1
      %v606 = vadd.f32 %v604, %v605
      %v607 = vadd.f32 %v585, %v606
      %608 = vst [vmem:[%s253] sm:$0x1] %v607
      %v609 = vld [vmem:[%s256] sm:$0x1]
      %v610 = vmul.f32 %v517, %v517
      %v611 = vmul.f32 %v520, %v520
      %v612 = vmul.f32 %v525, %v525
      %v613 = vmul.f32 %v528, %v528
      %v614 = vmul.f32 %v533, %v533
      %v615 = vmul.f32 %v536, %v536
      %v616 = vmul.f32 %v541, %v541
      %v617 = vmul.f32 %v544, %v544
      %v618 = vmul.f32 %v549, %v549
      %v619 = vmul.f32 %v552, %v552
      %v620 = vmul.f32 %v557, %v557
      %v621 = vmul.f32 %v560, %v560
      %v622 = vmul.f32 %v565, %v565
      %v623 = vmul.f32 %v568, %v568
      %v624 = vmul.f32 %v573, %v573
      %v625 = vmul.f32 %v576, %v576
      %v626 = vadd.f32 %v610, %v611
      %v627 = vadd.f32 %v626, %v612
      %v628 = vadd.f32 %v627, %v613
      %v629 = vadd.f32 %v628, %v614
      %v630 = vadd.f32 %v629, %v615
      %v631 = vadd.f32 %v630, %v616
      %v632 = vadd.f32 %v631, %v617
      %v633 = vadd.f32 %v632, %v618
      %v634 = vadd.f32 %v633, %v619
      %v635 = vadd.f32 %v634, %v620
      %v636 = vadd.f32 %v635, %v621
      %v637 = vadd.f32 %v636, %v622
      %v638 = vadd.f32 %v637, %v623
      %v639 = vadd.f32 %v638, %v624
      %v640 = vadd.f32 %v639, %v625
      %v641 = vrot.slane %v640, 4
      %v642 = vadd.f32 %v640, %v641
      %v643 = vrot.slane %v642, 2
      %v644 = vadd.f32 %v642, %v643
      %v645 = vrot.slane %v644, 1
      %v646 = vadd.f32 %v644, %v645
      %v647 = vadd.f32 %v609, %v646
      %648 = vst [vmem:[%s256] sm:$0x1] %v647
      %v649 = vpack.c.bf16 %v520, %v517
      %v650 = vpack.c.bf16 %v528, %v525
      %v651 = vpack.c.bf16 %v536, %v533
      %v652 = vpack.c.bf16 %v544, %v541
      %v653 = vpack.c.bf16 %v552, %v549
      %v654 = vpack.c.bf16 %v560, %v557
      %v655 = vpack.c.bf16 %v568, %v565
      %v656 = vpack.c.bf16 %v576, %v573
      %v665 = vunpack.c.l.b16 %v649
      %v666 = vunpack.c.h.b16 %v649
      %v667 = vunpack.c.l.b16 %v650
      %v668 = vunpack.c.h.b16 %v650
      %v669 = vunpack.c.l.b16 %v651
      %v670 = vunpack.c.h.b16 %v651
      %v671 = vunpack.c.l.b16 %v652
      %v672 = vunpack.c.h.b16 %v652
      %v673 = vunpack.c.l.b16 %v653
      %v674 = vunpack.c.h.b16 %v653
      %v675 = vunpack.c.l.b16 %v654
      %v676 = vunpack.c.h.b16 %v654
      %v677 = vunpack.c.l.b16 %v655
      %v678 = vunpack.c.h.b16 %v655
      %v679 = vunpack.c.l.b16 %v656
      %v680 = vunpack.c.h.b16 %v656
      %v681 = vpack.c.b16 %v665, %v665
      %v682 = vpack.c.b16 %v666, %v666
      %v683 = vpack.c.b16 %v667, %v667
      %v684 = vpack.c.b16 %v668, %v668
      %v685 = vpack.c.b16 %v669, %v669
      %v686 = vpack.c.b16 %v670, %v670
      %v687 = vpack.c.b16 %v671, %v671
      %v688 = vpack.c.b16 %v672, %v672
      %v689 = vpack.c.b16 %v673, %v673
      %v690 = vpack.c.b16 %v674, %v674
      %v691 = vpack.c.b16 %v675, %v675
      %v692 = vpack.c.b16 %v676, %v676
      %v693 = vpack.c.b16 %v677, %v677
      %v694 = vpack.c.b16 %v678, %v678
      %v695 = vpack.c.b16 %v679, %v679
      %v696 = vpack.c.b16 %v680, %v680
      %713 = vst [vmem:[%s247] sm:$0xf] %v681
      %714 = vst [vmem:[%s247 + $0x4] sm:$0xf] %v682
      %715 = vst [vmem:[%s247 + $0x8] sm:$0xf] %v683
      %716 = vst [vmem:[%s247 + $0xc] sm:$0xf] %v684
      %717 = vst [vmem:[%s247 + $0x10] sm:$0xf] %v685
      %718 = vst [vmem:[%s247 + $0x14] sm:$0xf] %v686
      %719 = vst [vmem:[%s247 + $0x18] sm:$0xf] %v687
      %720 = vst [vmem:[%s247 + $0x1c] sm:$0xf] %v688
      %721 = vst [vmem:[%s247 + $0x20] sm:$0xf] %v689
      %722 = vst [vmem:[%s247 + $0x24] sm:$0xf] %v690
      %723 = vst [vmem:[%s247 + $0x28] sm:$0xf] %v691
      %724 = vst [vmem:[%s247 + $0x2c] sm:$0xf] %v692
      %725 = vst [vmem:[%s247 + $0x30] sm:$0xf] %v693
      %726 = vst [vmem:[%s247 + $0x34] sm:$0xf] %v694
      %727 = vst [vmem:[%s247 + $0x38] sm:$0xf] %v695
      %728 = vst [vmem:[%s247 + $0x3c] sm:$0xf] %v696
      %s729 = smul.u32 %s20, 2
      %s730 = sadd.s32 %s729, %s21
      %s731 = smul.u32 16, %s730
      %p732 = scmp.lt.s32.totalorder %s731, 63
      %s733 = scalar_select %p732, %s731, 63
      %s734 = smul.addr %s733, 4
      %s735 = scalar_lea.vmem %s2, %s734
      %p736 = scmp.lt.s32.totalorder %s20, 1
      %s737 = scalar_select %p736, %s20, 1
      %s738 = scalar_lea.vmem %s3, %s737
      %p739 = scmp.lt.s32.totalorder %s20, 1
      %s740 = scalar_select %p739, %s20, 1
      %s741 = scalar_lea.vmem %s4, %s740
      // Predicated region
      $region33: #{only_image_forward.2} parent=27 // pred_check
        %p742 = pneg %p101
      $region34: #{only_image_forward.2} parent=27 // pred_check_branch
        %744 = sbr.rel (%p742) target = $region36
      $region35: #{only_image_forward.2} parent=27 // pred_region
        %s745 = smul.u32 %s20, 2
        %s746 = sadd.s32 %s745, %s21
        %s747 = smul.u32 16, %s746
      $region36: #{only_image_forward.2} parent=27 // pred_fallthru
        _
      // Predicated region
      $region37: #{only_image_forward.2} parent=27 // pred_check
        %p748 = pneg %p127
      $region38: #{only_image_forward.2} parent=27 // pred_check_branch
        %750 = sbr.rel (%p748) target = $region40
      $region39: #{only_image_forward.2} parent=27 // pred_region
        _
      $region40: #{only_image_forward.2} parent=27 // pred_fallthru
        _
      // Predicated region
      $region41: #{only_image_forward.2} parent=27 // pred_check
        %p751 = pneg %p153
      $region42: #{only_image_forward.2} parent=27 // pred_check_branch
        %753 = sbr.rel (%p751) target = $region44
      $region43: #{only_image_forward.2} parent=27 // pred_region
        _
      $region44: #{only_image_forward.2} parent=27 // pred_fallthru
        _
    $region28: #{only_image_forward.2} parent=5 // pred_fallthru
      _
    %p754 = scmp.le.s32.totalorder 2, %s11
    // Predicated region
    $region45: #{only_image_forward.2} parent=5 // pred_check
      %p755 = pneg %p754
    $region46: #{only_image_forward.2} parent=5 // pred_check_branch
      %757 = sbr.rel (%p755) target = $region48
    $region47: #{only_image_forward.2} parent=5 // pred_region
      %s758 = ssub.s32 %s11, 2
      // Predicated region
      $region49: #{only_image_forward.2} parent=47 // pred_check
        %p759 = pneg %p107
      $region50: #{only_image_forward.2} parent=47 // pred_check_branch
        %761 = sbr.rel (%p759) target = $region52
      $region51: #{only_image_forward.2} parent=47 // pred_region
        %s762 = smul.u32 %s22, 2
        %s763 = sadd.s32 %s762, %s23
        %s764 = smul.u32 16, %s763
        %p765 = scmp.lt.s32.totalorder %s764, 63
        %s766 = scalar_select %p765, %s764, 63
        %s767 = smul.addr %s766, 4
        %s768 = scalar_lea.vmem %s2, %s767
      $region52: #{only_image_forward.2} parent=47 // pred_fallthru
        _
      // Predicated region
      $region53: #{only_image_forward.2} parent=47 // pred_check
        %p769 = pneg %p133
      $region54: #{only_image_forward.2} parent=47 // pred_check_branch
        %771 = sbr.rel (%p769) target = $region56
      $region55: #{only_image_forward.2} parent=47 // pred_region
        %p772 = scmp.lt.s32.totalorder %s22, 1
        %s773 = scalar_select %p772, %s22, 1
        %s774 = scalar_lea.vmem %s3, %s773
      $region56: #{only_image_forward.2} parent=47 // pred_fallthru
        _
      // Predicated region
      $region57: #{only_image_forward.2} parent=47 // pred_check
        %p775 = pneg %p159
      $region58: #{only_image_forward.2} parent=47 // pred_check_branch
        %777 = sbr.rel (%p775) target = $region60
      $region59: #{only_image_forward.2} parent=47 // pred_region
        %p778 = scmp.lt.s32.totalorder %s22, 1
        %s779 = scalar_select %p778, %s22, 1
        %s780 = scalar_lea.vmem %s4, %s779
      $region60: #{only_image_forward.2} parent=47 // pred_fallthru
        _
    $region48: #{only_image_forward.2} parent=5 // pred_fallthru
      _
  $region6: #{only_image_forward.2} parent=0 // loop_footer
    %s15 = sadd.s32 1, %s11
  $region7: #{only_image_forward.2} parent=0 // loop_footer_branch
    %10 = sbr.rel target = $region3
  $region8: #{only_image_forward.2} parent=0 // loop_exit
    _

// kernel: only_image_forward.3
$region0: #{only_image_forward.3}
  #allocation0 [shape = 'u32[]', space=smem, size = 0x4, offset = 0x4, fixed_abs, tag = 'smem constant byte address 0x4 - core index']
  #allocation1 [shape = 'u32[144,128]{1,0:T(1,128)}', space=vmem, size = 0x12000, scoped, tag = 'internal scratch']
  %s0 = inlined_call_operand.vmem [shape: f32[2,1,128], index: 0, kind: input, shape index: {}]
  %s1 = inlined_call_operand.vmem [shape: f32[2,1,128], index: 1, kind: input, shape index: {}]
  %s2 = inlined_call_operand.vmem [shape: f32[2,128], index: 2, kind: input, shape index: {}]
  %s3 = inlined_call_operand.vmem [shape: f32[8,384], index: 3, kind: input, shape index: {}]
  %s4 = inlined_call_operand.vmem [shape: s32[256,1], index: 4, kind: input, shape index: {}]
  %s5 = inlined_call_operand.vmem [shape: bf16[512,128], index: 5, kind: input, shape index: {}, may-alias: {5,6}]
  %s6 = inlined_call_operand.vmem [shape: bf16[512,128], index: 6, kind: input, shape index: {}, may-alias: {5,6}]
  %s7 = inlined_call_operand.vmem [shape: f32[256,128], index: 7, kind: input, shape index: {}]
  %s8 = inlined_call_operand.vmem [shape: f32[256,128], index: 8, kind: input, shape index: {}]
  %s9 = inlined_call_operand.vmem [shape: f32[256,1], index: 9, kind: output, shape index: {}]
  %s10 = sld [smem:[#allocation0]]
  $region69: #{only_image_forward.3} parent=0
    _
  %s12 = ssub.s32 1, %s10
  %s13 = scalar_select 0, %s12, %s10
  loop: start=0, step=1, limit=4
  $region2: #{only_image_forward.3} parent=0 // loop_pre_header
    _
  $region3: #{only_image_forward.3} parent=0 // loop_header
    %s15 = sphi 0, %s19
    %p16 = scmp.ge.s32.totalorder %s15, 4
    %s23 = sphi 0, %s23
    %s25 = sphi 0, %s23
    %s26 = sphi 0, %s25
    %s40 = sphi 0, %s26
    %s44 = sphi 0, %s44
    %s46 = sphi 0, %s44
    %s47 = sphi 0, %s46
    %s61 = sphi 0, %s47
    %s65 = sphi 0, %s65
    %s67 = sphi 0, %s65
    %s68 = sphi 0, %s67
    %s82 = sphi 0, %s68
    %s86 = sphi 0, %s86
    %s88 = sphi 0, %s86
    %s89 = sphi 0, %s88
    %s103 = sphi 0, %s89
    %s109 = sphi 0, %s111
    %s112 = sphi 0, %s109
    %s113 = sphi 0, %s112
    %s129 = sphi 0, %s113
    %s135 = sphi 0, %s137
    %s138 = sphi 0, %s135
    %s139 = sphi 0, %s138
    %s155 = sphi 0, %s139
    %s163 = sphi 0, %s165
    %s166 = sphi 0, %s163
    %s167 = sphi 0, %s166
    %s183 = sphi 0, %s167
    %s189 = sphi 0, %s191
    %s192 = sphi 0, %s189
    %s193 = sphi 0, %s192
    %s209 = sphi 0, %s193
    %s215 = sphi 0, %s217
    %s218 = sphi 0, %s215
    %s219 = sphi 0, %s218
    %s235 = sphi 0, %s219
    %s241 = sphi 0, %s243
    %s244 = sphi 0, %s241
    %s245 = sphi 0, %s244
    %s261 = sphi 0, %s245
  $region4: #{only_image_forward.3} parent=0 // loop_header_branch
    %18 = sbr.rel (%p16) target = $region8
  $region5: #{only_image_forward.3} parent=0 // loop_body
    %s20 = ssub.s32 %s15, 1
    %s21 = ssub.s32 %s15, 2
    %s22 = sadd.s32 %s15, 1
    %s24 = sadd.s32 %s23, 1
    %p27 = scmp.eq.s32.totalorder %s15, 1
    %p28 = scmp.ne.s32.totalorder %s23, %s25
    %p29 = scmp.eq.s32.totalorder %s15, 0
    %p30 = por %p28, %p29
    %p31 = scmp.ne.s32.totalorder %s23, %s25
    %p32 = scmp.eq.s32.totalorder %s20, 1
    %p33 = por %p31, %p32
    %p34 = scmp.ne.s32.totalorder %s25, %s26
    %p35 = scmp.eq.s32.totalorder %s20, 0
    %p36 = por %p34, %p35
    %p37 = scmp.ne.s32.totalorder %s25, %s26
    %p38 = scmp.eq.s32.totalorder %s21, 1
    %p39 = por %p37, %p38
    %p41 = scmp.ne.s32.totalorder %s26, %s40
    %p42 = scmp.eq.s32.totalorder %s21, 0
    %p43 = por %p41, %p42
    %s45 = sadd.s32 %s44, 1
    %p48 = scmp.eq.s32.totalorder %s15, 1
    %p49 = scmp.ne.s32.totalorder %s44, %s46
    %p50 = scmp.eq.s32.totalorder %s15, 0
    %p51 = por %p49, %p50
    %p52 = scmp.ne.s32.totalorder %s44, %s46
    %p53 = scmp.eq.s32.totalorder %s20, 1
    %p54 = por %p52, %p53
    %p55 = scmp.ne.s32.totalorder %s46, %s47
    %p56 = scmp.eq.s32.totalorder %s20, 0
    %p57 = por %p55, %p56
    %p58 = scmp.ne.s32.totalorder %s46, %s47
    %p59 = scmp.eq.s32.totalorder %s21, 1
    %p60 = por %p58, %p59
    %p62 = scmp.ne.s32.totalorder %s47, %s61
    %p63 = scmp.eq.s32.totalorder %s21, 0
    %p64 = por %p62, %p63
    %s66 = sadd.s32 %s65, 1
    %p69 = scmp.eq.s32.totalorder %s15, 1
    %p70 = scmp.ne.s32.totalorder %s65, %s67
    %p71 = scmp.eq.s32.totalorder %s15, 0
    %p72 = por %p70, %p71
    %p73 = scmp.ne.s32.totalorder %s65, %s67
    %p74 = scmp.eq.s32.totalorder %s20, 1
    %p75 = por %p73, %p74
    %p76 = scmp.ne.s32.totalorder %s67, %s68
    %p77 = scmp.eq.s32.totalorder %s20, 0
    %p78 = por %p76, %p77
    %p79 = scmp.ne.s32.totalorder %s67, %s68
    %p80 = scmp.eq.s32.totalorder %s21, 1
    %p81 = por %p79, %p80
    %p83 = scmp.ne.s32.totalorder %s68, %s82
    %p84 = scmp.eq.s32.totalorder %s21, 0
    %p85 = por %p83, %p84
    %s87 = sadd.s32 %s86, 1
    %p90 = scmp.eq.s32.totalorder %s15, 1
    %p91 = scmp.ne.s32.totalorder %s86, %s88
    %p92 = scmp.eq.s32.totalorder %s15, 0
    %p93 = por %p91, %p92
    %p94 = scmp.ne.s32.totalorder %s86, %s88
    %p95 = scmp.eq.s32.totalorder %s20, 1
    %p96 = por %p94, %p95
    %p97 = scmp.ne.s32.totalorder %s88, %s89
    %p98 = scmp.eq.s32.totalorder %s20, 0
    %p99 = por %p97, %p98
    %p100 = scmp.ne.s32.totalorder %s88, %s89
    %p101 = scmp.eq.s32.totalorder %s21, 1
    %p102 = por %p100, %p101
    %p104 = scmp.ne.s32.totalorder %s89, %s103
    %p105 = scmp.eq.s32.totalorder %s21, 0
    %p106 = por %p104, %p105
    %s107 = ssub.s32 %s15, %s22
    %p108 = scmp.eq.s32.totalorder %s107, 0
    %s110 = sadd.s32 %s109, 1
    %s111 = scalar_select %p108, %s109, %s110
    %p114 = pneg %p108
    %p115 = scmp.eq.s32.totalorder %s15, 1
    %p116 = por %p114, %p115
    %p117 = scmp.ne.s32.totalorder %s109, %s112
    %p118 = scmp.eq.s32.totalorder %s15, 0
    %p119 = por %p117, %p118
    %p120 = scmp.ne.s32.totalorder %s109, %s112
    %p121 = scmp.eq.s32.totalorder %s20, 1
    %p122 = por %p120, %p121
    %p123 = scmp.ne.s32.totalorder %s112, %s113
    %p124 = scmp.eq.s32.totalorder %s20, 0
    %p125 = por %p123, %p124
    %p126 = scmp.ne.s32.totalorder %s112, %s113
    %p127 = scmp.eq.s32.totalorder %s21, 1
    %p128 = por %p126, %p127
    %p130 = scmp.ne.s32.totalorder %s113, %s129
    %p131 = scmp.eq.s32.totalorder %s21, 0
    %p132 = por %p130, %p131
    %s133 = ssub.s32 %s15, %s22
    %p134 = scmp.eq.s32.totalorder %s133, 0
    %s136 = sadd.s32 %s135, 1
    %s137 = scalar_select %p134, %s135, %s136
    %p140 = pneg %p134
    %p141 = scmp.eq.s32.totalorder %s15, 1
    %p142 = por %p140, %p141
    %p143 = scmp.ne.s32.totalorder %s135, %s138
    %p144 = scmp.eq.s32.totalorder %s15, 0
    %p145 = por %p143, %p144
    %p146 = scmp.ne.s32.totalorder %s135, %s138
    %p147 = scmp.eq.s32.totalorder %s20, 1
    %p148 = por %p146, %p147
    %p149 = scmp.ne.s32.totalorder %s138, %s139
    %p150 = scmp.eq.s32.totalorder %s20, 0
    %p151 = por %p149, %p150
    %p152 = scmp.ne.s32.totalorder %s138, %s139
    %p153 = scmp.eq.s32.totalorder %s21, 1
    %p154 = por %p152, %p153
    %p156 = scmp.ne.s32.totalorder %s139, %s155
    %p157 = scmp.eq.s32.totalorder %s21, 0
    %p158 = por %p156, %p157
    %s159 = sadd.s32 %s15, 2
    %s160 = sadd.s32 %s22, 2
    %s161 = ssub.s32 %s159, %s160
    %p162 = scmp.eq.s32.totalorder %s161, 0
    %s164 = sadd.s32 %s163, 1
    %s165 = scalar_select %p162, %s163, %s164
    %p168 = pneg %p162
    %p169 = scmp.eq.s32.totalorder %s15, 1
    %p170 = por %p168, %p169
    %p171 = scmp.ne.s32.totalorder %s163, %s166
    %p172 = scmp.eq.s32.totalorder %s15, 0
    %p173 = por %p171, %p172
    %p174 = scmp.ne.s32.totalorder %s163, %s166
    %p175 = scmp.eq.s32.totalorder %s20, 1
    %p176 = por %p174, %p175
    %p177 = scmp.ne.s32.totalorder %s166, %s167
    %p178 = scmp.eq.s32.totalorder %s20, 0
    %p179 = por %p177, %p178
    %p180 = scmp.ne.s32.totalorder %s166, %s167
    %p181 = scmp.eq.s32.totalorder %s21, 1
    %p182 = por %p180, %p181
    %p184 = scmp.ne.s32.totalorder %s167, %s183
    %p185 = scmp.eq.s32.totalorder %s21, 0
    %p186 = por %p184, %p185
    %s187 = ssub.s32 %s15, %s22
    %p188 = scmp.eq.s32.totalorder %s187, 0
    %s190 = sadd.s32 %s189, 1
    %s191 = scalar_select %p188, %s189, %s190
    %p194 = pneg %p188
    %p195 = scmp.eq.s32.totalorder %s15, 1
    %p196 = por %p194, %p195
    %p197 = scmp.ne.s32.totalorder %s189, %s192
    %p198 = scmp.eq.s32.totalorder %s15, 0
    %p199 = por %p197, %p198
    %p200 = scmp.ne.s32.totalorder %s189, %s192
    %p201 = scmp.eq.s32.totalorder %s20, 1
    %p202 = por %p200, %p201
    %p203 = scmp.ne.s32.totalorder %s192, %s193
    %p204 = scmp.eq.s32.totalorder %s20, 0
    %p205 = por %p203, %p204
    %p206 = scmp.ne.s32.totalorder %s192, %s193
    %p207 = scmp.eq.s32.totalorder %s21, 1
    %p208 = por %p206, %p207
    %p210 = scmp.ne.s32.totalorder %s193, %s209
    %p211 = scmp.eq.s32.totalorder %s21, 0
    %p212 = por %p210, %p211
    %s213 = ssub.s32 %s15, %s22
    %p214 = scmp.eq.s32.totalorder %s213, 0
    %s216 = sadd.s32 %s215, 1
    %s217 = scalar_select %p214, %s215, %s216
    %p220 = pneg %p214
    %p221 = scmp.eq.s32.totalorder %s15, 1
    %p222 = por %p220, %p221
    %p223 = scmp.ne.s32.totalorder %s215, %s218
    %p224 = scmp.eq.s32.totalorder %s15, 0
    %p225 = por %p223, %p224
    %p226 = scmp.ne.s32.totalorder %s215, %s218
    %p227 = scmp.eq.s32.totalorder %s20, 1
    %p228 = por %p226, %p227
    %p229 = scmp.ne.s32.totalorder %s218, %s219
    %p230 = scmp.eq.s32.totalorder %s20, 0
    %p231 = por %p229, %p230
    %p232 = scmp.ne.s32.totalorder %s218, %s219
    %p233 = scmp.eq.s32.totalorder %s21, 1
    %p234 = por %p232, %p233
    %p236 = scmp.ne.s32.totalorder %s219, %s235
    %p237 = scmp.eq.s32.totalorder %s21, 0
    %p238 = por %p236, %p237
    %s239 = ssub.s32 %s15, %s22
    %p240 = scmp.eq.s32.totalorder %s239, 0
    %s242 = sadd.s32 %s241, 1
    %s243 = scalar_select %p240, %s241, %s242
    %p246 = pneg %p240
    %p247 = scmp.eq.s32.totalorder %s15, 1
    %p248 = por %p246, %p247
    %p249 = scmp.ne.s32.totalorder %s241, %s244
    %p250 = scmp.eq.s32.totalorder %s15, 0
    %p251 = por %p249, %p250
    %p252 = scmp.ne.s32.totalorder %s241, %s244
    %p253 = scmp.eq.s32.totalorder %s20, 1
    %p254 = por %p252, %p253
    %p255 = scmp.ne.s32.totalorder %s244, %s245
    %p256 = scmp.eq.s32.totalorder %s20, 0
    %p257 = por %p255, %p256
    %p258 = scmp.ne.s32.totalorder %s244, %s245
    %p259 = scmp.eq.s32.totalorder %s21, 1
    %p260 = por %p258, %p259
    %p262 = scmp.ne.s32.totalorder %s245, %s261
    %p263 = scmp.eq.s32.totalorder %s21, 0
    %p264 = por %p262, %p263
    %p265 = scmp.le.s32.totalorder 1, %s15
    %p266 = scmp.lt.s32.totalorder %s15, 3
    %p267 = pnand %p265, %p266
    %p268 = pneg %p267
    // Predicated region
    $region9: #{only_image_forward.3} parent=5 // pred_check
      _
    $region10: #{only_image_forward.3} parent=5 // pred_check_branch
      %270 = sbr.rel (%p267) target = $region12
    $region11: #{only_image_forward.3} parent=5 // pred_region
      %s271 = ssub.s32 %s15, 1
      // Predicated region
      $region13: #{only_image_forward.3} parent=11 // pred_check
        %p272 = pneg %p36
      $region14: #{only_image_forward.3} parent=11 // pred_check_branch
        %274 = sbr.rel (%p272) target = $region16
      $region15: #{only_image_forward.3} parent=11 // pred_region
        _
      $region16: #{only_image_forward.3} parent=11 // pred_fallthru
        _
      // Predicated region
      $region17: #{only_image_forward.3} parent=11 // pred_check
        %p275 = pneg %p57
      $region18: #{only_image_forward.3} parent=11 // pred_check_branch
        %277 = sbr.rel (%p275) target = $region20
      $region19: #{only_image_forward.3} parent=11 // pred_region
        _
      $region20: #{only_image_forward.3} parent=11 // pred_fallthru
        _
      // Predicated region
      $region21: #{only_image_forward.3} parent=11 // pred_check
        %p278 = pneg %p78
      $region22: #{only_image_forward.3} parent=11 // pred_check_branch
        %280 = sbr.rel (%p278) target = $region24
      $region23: #{only_image_forward.3} parent=11 // pred_region
        _
      $region24: #{only_image_forward.3} parent=11 // pred_fallthru
        _
      // Predicated region
      $region25: #{only_image_forward.3} parent=11 // pred_check
        %p281 = pneg %p99
      $region26: #{only_image_forward.3} parent=11 // pred_check_branch
        %283 = sbr.rel (%p281) target = $region28
      $region27: #{only_image_forward.3} parent=11 // pred_region
        _
      $region28: #{only_image_forward.3} parent=11 // pred_fallthru
        _
    $region12: #{only_image_forward.3} parent=5 // pred_fallthru
      _
    %p284 = scmp.lt.s32.totalorder %s15, 2
    // Predicated region
    $region29: #{only_image_forward.3} parent=5 // pred_check
      %p285 = pneg %p284
    $region30: #{only_image_forward.3} parent=5 // pred_check_branch
      %287 = sbr.rel (%p285) target = $region32
    $region31: #{only_image_forward.3} parent=5 // pred_region
      // Predicated region
      $region33: #{only_image_forward.3} parent=31 // pred_check
        %p288 = pneg %p119
      $region34: #{only_image_forward.3} parent=31 // pred_check_branch
        %290 = sbr.rel (%p288) target = $region36
      $region35: #{only_image_forward.3} parent=31 // pred_region
        %s291 = smul.u32 16, %s15
        %p292 = scmp.lt.s32.totalorder %s291, 31
        %s293 = scalar_select %p292, %s291, 31
        %s294 = smul.addr %s293, 8
        %s295 = scalar_lea.vmem %s4, %s294
        %s296 = smul.u32 16, %s15
      $region36: #{only_image_forward.3} parent=31 // pred_fallthru
        _
      // Predicated region
      $region37: #{only_image_forward.3} parent=31 // pred_check
        %p297 = pneg %p145
      $region38: #{only_image_forward.3} parent=31 // pred_check_branch
        %299 = sbr.rel (%p297) target = $region40
      $region39: #{only_image_forward.3} parent=31 // pred_region
        %s300 = smul.u32 16, %s15
        %p301 = scmp.lt.s32.totalorder %s300, 63
        %s302 = scalar_select %p301, %s300, 63
        %s303 = smul.addr %s302, 4
        %s304 = scalar_lea.vmem %s5, %s303
        %s305 = smul.u32 16, %s15
      $region40: #{only_image_forward.3} parent=31 // pred_fallthru
        _
      // Predicated region
      $region41: #{only_image_forward.3} parent=31 // pred_check
        %p306 = pneg %p173
      $region42: #{only_image_forward.3} parent=31 // pred_check_branch
        %308 = sbr.rel (%p306) target = $region44
      $region43: #{only_image_forward.3} parent=31 // pred_region
        %s309 = sadd.s32 %s15, 2
        %s310 = smul.u32 16, %s309
        %p311 = scmp.lt.s32.totalorder %s310, 63
        %s312 = scalar_select %p311, %s310, 63
        %s313 = smul.addr %s312, 4
        %s314 = scalar_lea.vmem %s6, %s313
        %s315 = sadd.s32 %s15, 2
        %s316 = smul.u32 16, %s315
      $region44: #{only_image_forward.3} parent=31 // pred_fallthru
        _
      // Predicated region
      $region45: #{only_image_forward.3} parent=31 // pred_check
        %p317 = pneg %p199
      $region46: #{only_image_forward.3} parent=31 // pred_check_branch
        %319 = sbr.rel (%p317) target = $region48
      $region47: #{only_image_forward.3} parent=31 // pred_region
        %s320 = smul.u32 16, %s15
        %p321 = scmp.lt.s32.totalorder %s320, 31
        %s322 = scalar_select %p321, %s320, 31
        %s323 = smul.addr %s322, 8
        %s324 = scalar_lea.vmem %s7, %s323
        %s325 = smul.u32 16, %s15
      $region48: #{only_image_forward.3} parent=31 // pred_fallthru
        _
      // Predicated region
      $region49: #{only_image_forward.3} parent=31 // pred_check
        %p326 = pneg %p225
      $region50: #{only_image_forward.3} parent=31 // pred_check_branch
        %328 = sbr.rel (%p326) target = $region52
      $region51: #{only_image_forward.3} parent=31 // pred_region
        %s329 = smul.u32 16, %s15
        %p330 = scmp.lt.s32.totalorder %s329, 31
        %s331 = scalar_select %p330, %s329, 31
        %s332 = smul.addr %s331, 8
        %s333 = scalar_lea.vmem %s8, %s332
        %s334 = smul.u32 16, %s15
      $region52: #{only_image_forward.3} parent=31 // pred_fallthru
        _
    $region32: #{only_image_forward.3} parent=5 // pred_fallthru
      _
    %p335 = scmp.le.s32.totalorder 1, %s15
    %p336 = scmp.lt.s32.totalorder %s15, 3
    %p337 = pnand %p335, %p336
    %p338 = pneg %p337
    // Predicated region
    $region53: #{only_image_forward.3} parent=5 // pred_check
      _
    $region54: #{only_image_forward.3} parent=5 // pred_check_branch
      %340 = sbr.rel (%p337) target = $region56
    $region55: #{only_image_forward.3} parent=5 // pred_region
      %s341 = ssub.s32 %s15, 1
      %p342 = pneg %p36
      %p343 = pneg %p33
      %p344 = pneg %p57
      %p345 = pneg %p54
      %p346 = pneg %p78
      %p347 = pneg %p75
      %p348 = pneg %p99
      %p349 = pneg %p96
      %s350 = smul.u32 16, %s20
      %p351 = scmp.lt.s32.totalorder %s350, 31
      %s352 = scalar_select %p351, %s350, 31
      %s353 = smul.addr %s352, 8
      %s354 = scalar_lea.vmem %s4, %s353
      %p355 = pneg %p125
      %p356 = pneg %p122
      %s357 = smul.u32 16, %s20
      %p358 = scmp.lt.s32.totalorder %s357, 63
      %s359 = scalar_select %p358, %s357, 63
      %s360 = smul.addr %s359, 4
      %s361 = scalar_lea.vmem %s5, %s360
      %p362 = pneg %p151
      %p363 = pneg %p148
      %s364 = sadd.s32 %s20, 2
      %s365 = smul.u32 16, %s364
      %p366 = scmp.lt.s32.totalorder %s365, 63
      %s367 = scalar_select %p366, %s365, 63
      %s368 = smul.addr %s367, 4
      %s369 = scalar_lea.vmem %s6, %s368
      %p370 = pneg %p179
      %p371 = pneg %p176
      %s372 = smul.u32 16, %s20
      %p373 = scmp.lt.s32.totalorder %s372, 31
      %s374 = scalar_select %p373, %s372, 31
      %s375 = smul.addr %s374, 8
      %s376 = scalar_lea.vmem %s7, %s375
      %p377 = pneg %p205
      %p378 = pneg %p202
      %s379 = smul.u32 16, %s20
      %p380 = scmp.lt.s32.totalorder %s379, 31
      %s381 = scalar_select %p380, %s379, 31
      %s382 = smul.addr %s381, 8
      %s383 = scalar_lea.vmem %s8, %s382
      %p384 = pneg %p231
      %p385 = pneg %p228
      %p386 = pneg %p257
      %p387 = pneg %p254
      %s388 = smul.u32 16, %s20
      %p389 = scmp.lt.s32.totalorder %s388, 31
      %s390 = scalar_select %p389, %s388, 31
      %s391 = smul.addr %s390, 8
      %s392 = scalar_lea.vmem %s9, %s391
      %s393 = smul.u32 16, %s20
      %p394 = scmp.lt.s32.totalorder %s393, 31
      %s395 = scalar_select %p394, %s393, 31
      %s396 = smul.addr %s395, 8
      %s397 = scalar_lea.vmem %s4, %s396
      %s398 = smul.u32 16, %s20
      %s399 = smul.u32 16, %s20
      %p400 = scmp.lt.s32.totalorder %s399, 63
      %s401 = scalar_select %p400, %s399, 63
      %s402 = smul.addr %s401, 4
      %s403 = scalar_lea.vmem %s5, %s402
      %s404 = smul.u32 16, %s20
      %s405 = sadd.s32 %s20, 2
      %s406 = smul.u32 16, %s405
      %p407 = scmp.lt.s32.totalorder %s406, 63
      %s408 = scalar_select %p407, %s406, 63
      %s409 = smul.addr %s408, 4
      %s410 = scalar_lea.vmem %s6, %s409
      %s411 = sadd.s32 %s20, 2
      %s412 = smul.u32 16, %s411
      %s413 = smul.u32 16, %s20
      %p414 = scmp.lt.s32.totalorder %s413, 31
      %s415 = scalar_select %p414, %s413, 31
      %s416 = smul.addr %s415, 8
      %s417 = scalar_lea.vmem %s7, %s416
      %s418 = smul.u32 16, %s20
      %s419 = smul.u32 16, %s20
      %p420 = scmp.lt.s32.totalorder %s419, 31
      %s421 = scalar_select %p420, %s419, 31
      %s422 = smul.addr %s421, 8
      %s423 = scalar_lea.vmem %s8, %s422
      %s424 = smul.u32 16, %s20
      %s425 = smul.u32 16, %s20
      %p426 = scmp.lt.s32.totalorder %s425, 31
      %s427 = scalar_select %p426, %s425, 31
      %s428 = smul.addr %s427, 8
      %s429 = scalar_lea.vmem %s9, %s428
      %s430 = smul.u32 16, %s20
      %v431 = vld [vmem:[%s0] sm:$0x1]
      %v432 = vld [vmem:[%s0 + $0x1] sm:$0x1]
      %v433 = vmul.f32 %v431, 0.00390625
      %v434 = vmul.f32 %v432, 0.00390625
      %v435 = vld [vmem:[%s1] sm:$0x1]
      %v436 = vld [vmem:[%s1 + $0x1] sm:$0x1]
      %v437 = vmul.f32 %v435, 0.00390625
      %v438 = vmul.f32 %v436, 0.00390625
      %v439 = vmul.f32 %v433, %v433
      %v440 = vmul.f32 %v434, %v434
      %v441 = vsub.f32 %v437, %v439
      %v442 = vsub.f32 %v438, %v440
      %v443 = vmax.f32 %v441, 0.0
      %v444 = vmax.f32 %v442, 0.0
      %v445 = vld [vmem:[%s2] sm:$0x1]
      %v446 = vld [vmem:[%s2 + $0x1] sm:$0x1]
      %v447 = vadd.f32 %v443, 1e-05
      %v448 = vadd.f32 %v444, 1e-05
      %v449 = vrsqrt.pop %v447
      %v450 = vrsqrt.pop %v448
      %v451 = vmul.f32 %v449, %v445
      %v452 = vmul.f32 %v450, %v445
      %v453 = vmul.f32 %v433, %v451
      %v454 = vmul.f32 %v434, %v452
      %v455 = vsub.f32 %v446, %v453
      %v456 = vsub.f32 %v446, %v454
      %v457 = vlaneseq
      %v458 = vand.u32 %v457, 127
      %v459 = vld [vmem:[%s397] sm:$0xff]
      %v460 = vld [vmem:[%s397 + $0x8] sm:$0xff]
      %v461 = vld [vmem:[%s397 + $0x10] sm:$0xff]
      %v462 = vld [vmem:[%s397 + $0x18] sm:$0xff]
      %v463 = vld [vmem:[%s397 + $0x20] sm:$0xff]
      %v464 = vld [vmem:[%s397 + $0x28] sm:$0xff]
      %v465 = vld [vmem:[%s397 + $0x30] sm:$0xff]
      %v466 = vld [vmem:[%s397 + $0x38] sm:$0xff]
      %v467 = vld [vmem:[%s397 + $0x40] sm:$0xff]
      %v468 = vld [vmem:[%s397 + $0x48] sm:$0xff]
      %v469 = vld [vmem:[%s397 + $0x50] sm:$0xff]
      %v470 = vld [vmem:[%s397 + $0x58] sm:$0xff]
      %v471 = vld [vmem:[%s397 + $0x60] sm:$0xff]
      %v472 = vld [vmem:[%s397 + $0x68] sm:$0xff]
      %v473 = vld [vmem:[%s397 + $0x70] sm:$0xff]
      %v474 = vld [vmem:[%s397 + $0x78] sm:$0xff]
      %475 = vset.pattern.permute.xlu0 0
      %476 = vperm.xlu0 %475, %v459
      %v477 = vpop.permute.xlu0 %476
      %478 = vset.pattern.permute.xlu0 0
      %479 = vperm.xlu0 %478, %v460
      %v480 = vpop.permute.xlu0 %479
      %481 = vset.pattern.permute.xlu0 0
      %482 = vperm.xlu0 %481, %v461
      %v483 = vpop.permute.xlu0 %482
      %484 = vset.pattern.permute.xlu0 0
      %485 = vperm.xlu0 %484, %v462
      %v486 = vpop.permute.xlu0 %485
      %487 = vset.pattern.permute.xlu0 0
      %488 = vperm.xlu0 %487, %v463
      %v489 = vpop.permute.xlu0 %488
      %490 = vset.pattern.permute.xlu0 0
      %491 = vperm.xlu0 %490, %v464
      %v492 = vpop.permute.xlu0 %491
      %493 = vset.pattern.permute.xlu0 0
      %494 = vperm.xlu0 %493, %v465
      %v495 = vpop.permute.xlu0 %494
      %496 = vset.pattern.permute.xlu0 0
      %497 = vperm.xlu0 %496, %v466
      %v498 = vpop.permute.xlu0 %497
      %499 = vset.pattern.permute.xlu0 0
      %500 = vperm.xlu0 %499, %v467
      %v501 = vpop.permute.xlu0 %500
      %502 = vset.pattern.permute.xlu0 0
      %503 = vperm.xlu0 %502, %v468
      %v504 = vpop.permute.xlu0 %503
      %505 = vset.pattern.permute.xlu0 0
      %506 = vperm.xlu0 %505, %v469
      %v507 = vpop.permute.xlu0 %506
      %508 = vset.pattern.permute.xlu0 0
      %509 = vperm.xlu0 %508, %v470
      %v510 = vpop.permute.xlu0 %509
      %511 = vset.pattern.permute.xlu0 0
      %512 = vperm.xlu0 %511, %v471
      %v513 = vpop.permute.xlu0 %512
      %514 = vset.pattern.permute.xlu0 0
      %515 = vperm.xlu0 %514, %v472
      %v516 = vpop.permute.xlu0 %515
      %517 = vset.pattern.permute.xlu0 0
      %518 = vperm.xlu0 %517, %v473
      %v519 = vpop.permute.xlu0 %518
      %520 = vset.pattern.permute.xlu0 0
      %521 = vperm.xlu0 %520, %v474
      %v522 = vpop.permute.xlu0 %521
      %vm523 = vcmp.eq.s32.totalorder %v477, %v458
      %vm524 = vcmp.eq.s32.totalorder %v480, %v458
      %vm525 = vcmp.eq.s32.totalorder %v483, %v458
      %vm526 = vcmp.eq.s32.totalorder %v486, %v458
      %vm527 = vcmp.eq.s32.totalorder %v489, %v458
      %vm528 = vcmp.eq.s32.totalorder %v492, %v458
      %vm529 = vcmp.eq.s32.totalorder %v495, %v458
      %vm530 = vcmp.eq.s32.totalorder %v498, %v458
      %vm531 = vcmp.eq.s32.totalorder %v501, %v458
      %vm532 = vcmp.eq.s32.totalorder %v504, %v458
      %vm533 = vcmp.eq.s32.totalorder %v507, %v458
      %vm534 = vcmp.eq.s32.totalorder %v510, %v458
      %vm535 = vcmp.eq.s32.totalorder %v513, %v458
      %vm536 = vcmp.eq.s32.totalorder %v516, %v458
      %vm537 = vcmp.eq.s32.totalorder %v519, %v458
      %vm538 = vcmp.eq.s32.totalorder %v522, %v458
      %v539 = vsel %vm523, 1.0, 0.0
      %v540 = vsel %vm524, 1.0, 0.0
      %v541 = vsel %vm525, 1.0, 0.0
      %v542 = vsel %vm526, 1.0, 0.0
      %v543 = vsel %vm527, 1.0, 0.0
      %v544 = vsel %vm528, 1.0, 0.0
      %v545 = vsel %vm529, 1.0, 0.0
      %v546 = vsel %vm530, 1.0, 0.0
      %v547 = vsel %vm531, 1.0, 0.0
      %v548 = vsel %vm532, 1.0, 0.0
      %v549 = vsel %vm533, 1.0, 0.0
      %v550 = vsel %vm534, 1.0, 0.0
      %v551 = vsel %vm535, 1.0, 0.0
      %v552 = vsel %vm536, 1.0, 0.0
      %v553 = vsel %vm537, 1.0, 0.0
      %v554 = vsel %vm538, 1.0, 0.0
      %v555 = vld [vmem:[%s3] sm:$0xff]
      %v556 = vld [vmem:[%s3 + $0x8] sm:$0xff]
      %v557 = vld [vmem:[%s3 + $0x10] sm:$0xff]
      %vm558 = vcmask 64512
      %v560 = vsel %vm558, %v539, 0
      %v563 = vsel %vm558, %v540, 0
      %v566 = vsel %vm558, %v541, 0
      %v569 = vsel %vm558, %v542, 0
      %v572 = vsel %vm558, %v543, 0
      %v575 = vsel %vm558, %v544, 0
      %v578 = vsel %vm558, %v545, 0
      %v581 = vsel %vm558, %v546, 0
      %v584 = vsel %vm558, %v547, 0
      %v587 = vsel %vm558, %v548, 0
      %v590 = vsel %vm558, %v549, 0
      %v593 = vsel %vm558, %v550, 0
      %v596 = vsel %vm558, %v551, 0
      %v599 = vsel %vm558, %v552, 0
      %v602 = vsel %vm558, %v553, 0
      %v605 = vsel %vm558, %v554, 0
      %607 = vmatprep.subr.mxu0 %v556
      %608 = vmatpush1.msra.mxu0 %v555
      %609 = vmatprep.subr.mxu0 0.0
      %610 = vmatpush1.msra.mxu0 0.0
      %611 = vmatprep.subr.mxu0 0.0
      %612 = vmatpush1.msra.mxu0 0.0
      %613 = vmatprep.subr.mxu0 0.0
      %614 = vmatpush1.msra.mxu0 0.0
      %615 = vmatprep.subr.mxu0 0.0
      %616 = vmatpush1.msra.mxu0 0.0
      %617 = vmatprep.subr.mxu0 0.0
      %618 = vmatpush1.msra.mxu0 0.0
      %619 = vmatprep.subr.mxu0 0.0
      %620 = vmatpush1.msra.mxu0 0.0
      %621 = vmatprep.subr.mxu0 0.0
      %622 = vmatpush1.msra.mxu0 0.0
      %623 = vmatprep.subr.mxu0 0.0
      %624 = vmatpush1.msra.mxu0 0.0
      %625 = vmatprep.subr.mxu0 0.0
      %626 = vmatpush1.msra.mxu0 0.0
      %627 = vmatprep.subr.mxu0 0.0
      %628 = vmatpush1.msra.mxu0 0.0
      %629 = vmatprep.subr.mxu0 0.0
      %630 = vmatpush1.msra.mxu0 0.0
      %631 = vmatprep.subr.mxu0 0.0
      %632 = vmatpush1.msra.mxu0 0.0
      %633 = vmatprep.subr.mxu0 0.0
      %634 = vmatpush1.msra.mxu0 0.0
      %635 = vmatprep.subr.mxu0 0.0
      %636 = vmatpush1.msra.mxu0 0.0
      %637 = vmatprep.subr.mxu0 0.0
      %638 = vmatpush1.msra.mxu0 0.0
      %639 = vmatprep.subr.mxu0 0.0
      %640 = vmatpush1.msra.mxu0 0.0
      %641 = vmatprep.subr.mxu0 0.0
      %642 = vmatpush1.msra.mxu0 0.0
      %643 = vmatprep.subr.mxu0 0.0
      %644 = vmatpush1.msra.mxu0 0.0
      %645 = vmatprep.subr.mxu0 0.0
      %646 = vmatpush1.msra.mxu0 0.0
      %647 = vmatprep.subr.mxu0 0.0
      %648 = vmatpush1.msra.mxu0 0.0
      %649 = vmatprep.subr.mxu0 0.0
      %650 = vmatpush1.msra.mxu0 0.0
      %651 = vmatprep.subr.mxu0 0.0
      %652 = vmatpush1.msra.mxu0 0.0
      %653 = vmatprep.subr.mxu0 0.0
      %654 = vmatpush1.msra.mxu0 0.0
      %655 = vmatprep.subr.mxu0 0.0
      %656 = vmatpush1.msra.mxu0 0.0
      %657 = vmatprep.subr.mxu0 0.0
      %658 = vmatpush1.msra.mxu0 0.0
      %659 = vmatprep.subr.mxu0 0.0
      %660 = vmatpush1.msra.mxu0 0.0
      %661 = vmatprep.subr.mxu0 0.0
      %662 = vmatpush1.msra.mxu0 0.0
      %663 = vmatprep.subr.mxu0 0.0
      %664 = vmatpush1.msra.mxu0 0.0
      %665 = vmatprep.subr.mxu0 0.0
      %666 = vmatpush1.msra.mxu0 0.0
      %667 = vmatprep.subr.mxu0 0.0
      %668 = vmatpush1.msra.mxu0 0.0
      %669 = vmatprep.subr.mxu0 0.0
      %670 = vmatpush1.msra.mxu0 0.0
      %671 = vmatprep.mubr.f32.mxu0 0.0
      %672 = vmatmul.mubr.f32.gmra.mrb[0].mxu0 %v560
      %v673 = vpop.f32.mrb[0].mxu0
      %v674 = vadd.f32 0.0, %v673
      %v675 = vpop.f32.mrb[0].mxu0
      %v676 = vadd.f32 0.0, %v675
      %677 = vmatprep.mubr.f32.mxu0 0.0
      %678 = vmatmul.mubr.f32.gmra.mrb[0].mxu0 %v563
      %v679 = vpop.f32.mrb[0].mxu0
      %v680 = vadd.f32 0.0, %v679
      %v681 = vpop.f32.mrb[0].mxu0
      %v682 = vadd.f32 0.0, %v681
      %683 = vmatprep.mubr.f32.mxu0 0.0
      %684 = vmatmul.mubr.f32.gmra.mrb[0].mxu0 %v566
      %v685 = vpop.f32.mrb[0].mxu0
      %v686 = vadd.f32 0.0, %v685
      %v687 = vpop.f32.mrb[0].mxu0
      %v688 = vadd.f32 0.0, %v687
      %689 = vmatprep.mubr.f32.mxu0 0.0
      %690 = vmatmul.mubr.f32.gmra.mrb[0].mxu0 %v569
      %v691 = vpop.f32.mrb[0].mxu0
      %v692 = vadd.f32 0.0, %v691
      %v693 = vpop.f32.mrb[0].mxu0
      %v694 = vadd.f32 0.0, %v693
      %695 = vmatprep.mubr.f32.mxu0 0.0
      %696 = vmatmul.mubr.f32.gmra.mrb[0].mxu0 %v572
      %v697 = vpop.f32.mrb[0].mxu0
      %v698 = vadd.f32 0.0, %v697
      %v699 = vpop.f32.mrb[0].mxu0
      %v700 = vadd.f32 0.0, %v699
      %701 = vmatprep.mubr.f32.mxu0 0.0
      %702 = vmatmul.mubr.f32.gmra.mrb[0].mxu0 %v575
      %v703 = vpop.f32.mrb[0].mxu0
      %v704 = vadd.f32 0.0, %v703
      %v705 = vpop.f32.mrb[0].mxu0
      %v706 = vadd.f32 0.0, %v705
      %707 = vmatprep.mubr.f32.mxu0 0.0
      %708 = vmatmul.mubr.f32.gmra.mrb[0].mxu0 %v578
      %v709 = vpop.f32.mrb[0].mxu0
      %v710 = vadd.f32 0.0, %v709
      %v711 = vpop.f32.mrb[0].mxu0
      %v712 = vadd.f32 0.0, %v711
      %713 = vmatprep.mubr.f32.mxu0 0.0
      %714 = vmatmul.mubr.f32.gmra.mrb[0].mxu0 %v581
      %v715 = vpop.f32.mrb[0].mxu0
      %v716 = vadd.f32 0.0, %v715
      %v717 = vpop.f32.mrb[0].mxu0
      %v718 = vadd.f32 0.0, %v717
      %719 = vmatprep.mubr.f32.mxu0 0.0
      %720 = vmatmul.mubr.f32.gmra.mrb[0].mxu0 %v584
      %v721 = vpop.f32.mrb[0].mxu0
      %v722 = vadd.f32 0.0, %v721
      %v723 = vpop.f32.mrb[0].mxu0
      %v724 = vadd.f32 0.0, %v723
      %725 = vmatprep.mubr.f32.mxu0 0.0
      %726 = vmatmul.mubr.f32.gmra.mrb[0].mxu0 %v587
      %v727 = vpop.f32.mrb[0].mxu0
      %v728 = vadd.f32 0.0, %v727
      %v729 = vpop.f32.mrb[0].mxu0
      %v730 = vadd.f32 0.0, %v729
      %731 = vmatprep.mubr.f32.mxu0 0.0
      %732 = vmatmul.mubr.f32.gmra.mrb[0].mxu0 %v590
      %v733 = vpop.f32.mrb[0].mxu0
      %v734 = vadd.f32 0.0, %v733
      %v735 = vpop.f32.mrb[0].mxu0
      %v736 = vadd.f32 0.0, %v735
      %737 = vmatprep.mubr.f32.mxu0 0.0
      %738 = vmatmul.mubr.f32.gmra.mrb[0].mxu0 %v593
      %v739 = vpop.f32.mrb[0].mxu0
      %v740 = vadd.f32 0.0, %v739
      %v741 = vpop.f32.mrb[0].mxu0
      %v742 = vadd.f32 0.0, %v741
      %743 = vmatprep.mubr.f32.mxu0 0.0
      %744 = vmatmul.mubr.f32.gmra.mrb[0].mxu0 %v596
      %v745 = vpop.f32.mrb[0].mxu0
      %v746 = vadd.f32 0.0, %v745
      %v747 = vpop.f32.mrb[0].mxu0
      %v748 = vadd.f32 0.0, %v747
      %749 = vmatprep.mubr.f32.mxu0 0.0
      %750 = vmatmul.mubr.f32.gmra.mrb[0].mxu0 %v599
      %v751 = vpop.f32.mrb[0].mxu0
      %v752 = vadd.f32 0.0, %v751
      %v753 = vpop.f32.mrb[0].mxu0
      %v754 = vadd.f32 0.0, %v753
      %755 = vmatprep.mubr.f32.mxu0 0.0
      %756 = vmatmul.mubr.f32.gmra.mrb[0].mxu0 %v602
      %v757 = vpop.f32.mrb[0].mxu0
      %v758 = vadd.f32 0.0, %v757
      %v759 = vpop.f32.mrb[0].mxu0
      %v760 = vadd.f32 0.0, %v759
      %761 = vmatprep.mubr.f32.mxu0 0.0
      %762 = vmatmul.mubr.f32.gmra.mrb[0].mxu0 %v605
      %v763 = vpop.f32.mrb[0].mxu0
      %v764 = vadd.f32 0.0, %v763
      %v765 = vpop.f32.mrb[0].mxu0
      %v766 = vadd.f32 0.0, %v765
      %767 = vdwg.mxu0
      %768 = vmatprep.subr.mxu0 0.0
      %769 = vmatpush1.msra.mxu0 %v557
      %770 = vmatprep.subr.mxu0 0.0
      %771 = vmatpush1.msra.mxu0 0.0
      %772 = vmatprep.subr.mxu0 0.0
      %773 = vmatpush1.msra.mxu0 0.0
      %774 = vmatprep.subr.mxu0 0.0
      %775 = vmatpush1.msra.mxu0 0.0
      %776 = vmatprep.subr.mxu0 0.0
      %777 = vmatpush1.msra.mxu0 0.0
      %778 = vmatprep.subr.mxu0 0.0
      %779 = vmatpush1.msra.mxu0 0.0
      %780 = vmatprep.subr.mxu0 0.0
      %781 = vmatpush1.msra.mxu0 0.0
      %782 = vmatprep.subr.mxu0 0.0
      %783 = vmatpush1.msra.mxu0 0.0
      %784 = vmatprep.subr.mxu0 0.0
      %785 = vmatpush1.msra.mxu0 0.0
      %786 = vmatprep.subr.mxu0 0.0
      %787 = vmatpush1.msra.mxu0 0.0
      %788 = vmatprep.subr.mxu0 0.0
      %789 = vmatpush1.msra.mxu0 0.0
      %790 = vmatprep.subr.mxu0 0.0
      %791 = vmatpush1.msra.mxu0 0.0
      %792 = vmatprep.subr.mxu0 0.0
      %793 = vmatpush1.msra.mxu0 0.0
      %794 = vmatprep.subr.mxu0 0.0
      %795 = vmatpush1.msra.mxu0 0.0
      %796 = vmatprep.subr.mxu0 0.0
      %797 = vmatpush1.msra.mxu0 0.0
      %798 = vmatprep.subr.mxu0 0.0
      %799 = vmatpush1.msra.mxu0 0.0
      %800 = vmatprep.subr.mxu0 0.0
      %801 = vmatpush1.msra.mxu0 0.0
      %802 = vmatprep.subr.mxu0 0.0
      %803 = vmatpush1.msra.mxu0 0.0
      %804 = vmatprep.subr.mxu0 0.0
      %805 = vmatpush1.msra.mxu0 0.0
      %806 = vmatprep.subr.mxu0 0.0
      %807 = vmatpush1.msra.mxu0 0.0
      %808 = vmatprep.subr.mxu0 0.0
      %809 = vmatpush1.msra.mxu0 0.0
      %810 = vmatprep.subr.mxu0 0.0
      %811 = vmatpush1.msra.mxu0 0.0
      %812 = vmatprep.subr.mxu0 0.0
      %813 = vmatpush1.msra.mxu0 0.0
      %814 = vmatprep.subr.mxu0 0.0
      %815 = vmatpush1.msra.mxu0 0.0
      %816 = vmatprep.subr.mxu0 0.0
      %817 = vmatpush1.msra.mxu0 0.0
      %818 = vmatprep.subr.mxu0 0.0
      %819 = vmatpush1.msra.mxu0 0.0
      %820 = vmatprep.subr.mxu0 0.0
      %821 = vmatpush1.msra.mxu0 0.0
      %822 = vmatprep.subr.mxu0 0.0
      %823 = vmatpush1.msra.mxu0 0.0
      %824 = vmatprep.subr.mxu0 0.0
      %825 = vmatpush1.msra.mxu0 0.0
      %826 = vmatprep.subr.mxu0 0.0
      %827 = vmatpush1.msra.mxu0 0.0
      %828 = vmatprep.subr.mxu0 0.0
      %829 = vmatpush1.msra.mxu0 0.0
      %830 = vmatprep.subr.mxu0 0.0
      %831 = vmatpush1.msra.mxu0 0.0
      %832 = vmatprep.mubr.f32.mxu0 0.0
      %833 = vmatmul.mubr.f32.gmra.mrb[0].mxu0 %v560
      %v834 = vpop.f32.mrb[0].mxu0
      %v835 = vadd.f32 0.0, %v834
      %v836 = vpop.f32.mrb[0].mxu0
      %837 = vmatprep.mubr.f32.mxu0 0.0
      %838 = vmatmul.mubr.f32.gmra.mrb[0].mxu0 %v563
      %v839 = vpop.f32.mrb[0].mxu0
      %v840 = vadd.f32 0.0, %v839
      %v841 = vpop.f32.mrb[0].mxu0
      %842 = vmatprep.mubr.f32.mxu0 0.0
      %843 = vmatmul.mubr.f32.gmra.mrb[0].mxu0 %v566
      %v844 = vpop.f32.mrb[0].mxu0
      %v845 = vadd.f32 0.0, %v844
      %v846 = vpop.f32.mrb[0].mxu0
      %847 = vmatprep.mubr.f32.mxu0 0.0
      %848 = vmatmul.mubr.f32.gmra.mrb[0].mxu0 %v569
      %v849 = vpop.f32.mrb[0].mxu0
      %v850 = vadd.f32 0.0, %v849
      %v851 = vpop.f32.mrb[0].mxu0
      %852 = vmatprep.mubr.f32.mxu0 0.0
      %853 = vmatmul.mubr.f32.gmra.mrb[0].mxu0 %v572
      %v854 = vpop.f32.mrb[0].mxu0
      %v855 = vadd.f32 0.0, %v854
      %v856 = vpop.f32.mrb[0].mxu0
      %857 = vmatprep.mubr.f32.mxu0 0.0
      %858 = vmatmul.mubr.f32.gmra.mrb[0].mxu0 %v575
      %v859 = vpop.f32.mrb[0].mxu0
      %v860 = vadd.f32 0.0, %v859
      %v861 = vpop.f32.mrb[0].mxu0
      %862 = vmatprep.mubr.f32.mxu0 0.0
      %863 = vmatmul.mubr.f32.gmra.mrb[0].mxu0 %v578
      %v864 = vpop.f32.mrb[0].mxu0
      %v865 = vadd.f32 0.0, %v864
      %v866 = vpop.f32.mrb[0].mxu0
      %867 = vmatprep.mubr.f32.mxu0 0.0
      %868 = vmatmul.mubr.f32.gmra.mrb[0].mxu0 %v581
      %v869 = vpop.f32.mrb[0].mxu0
      %v870 = vadd.f32 0.0, %v869
      %v871 = vpop.f32.mrb[0].mxu0
      %872 = vmatprep.mubr.f32.mxu0 0.0
      %873 = vmatmul.mubr.f32.gmra.mrb[0].mxu0 %v584
      %v874 = vpop.f32.mrb[0].mxu0
      %v875 = vadd.f32 0.0, %v874
      %v876 = vpop.f32.mrb[0].mxu0
      %877 = vmatprep.mubr.f32.mxu0 0.0
      %878 = vmatmul.mubr.f32.gmra.mrb[0].mxu0 %v587
      %v879 = vpop.f32.mrb[0].mxu0
      %v880 = vadd.f32 0.0, %v879
      %v881 = vpop.f32.mrb[0].mxu0
      %882 = vmatprep.mubr.f32.mxu0 0.0
      %883 = vmatmul.mubr.f32.gmra.mrb[0].mxu0 %v590
      %v884 = vpop.f32.mrb[0].mxu0
      %v885 = vadd.f32 0.0, %v884
      %v886 = vpop.f32.mrb[0].mxu0
      %887 = vmatprep.mubr.f32.mxu0 0.0
      %888 = vmatmul.mubr.f32.gmra.mrb[0].mxu0 %v593
      %v889 = vpop.f32.mrb[0].mxu0
      %v890 = vadd.f32 0.0, %v889
      %v891 = vpop.f32.mrb[0].mxu0
      %892 = vmatprep.mubr.f32.mxu0 0.0
      %893 = vmatmul.mubr.f32.gmra.mrb[0].mxu0 %v596
      %v894 = vpop.f32.mrb[0].mxu0
      %v895 = vadd.f32 0.0, %v894
      %v896 = vpop.f32.mrb[0].mxu0
      %897 = vmatprep.mubr.f32.mxu0 0.0
      %898 = vmatmul.mubr.f32.gmra.mrb[0].mxu0 %v599
      %v899 = vpop.f32.mrb[0].mxu0
      %v900 = vadd.f32 0.0, %v899
      %v901 = vpop.f32.mrb[0].mxu0
      %902 = vmatprep.mubr.f32.mxu0 0.0
      %903 = vmatmul.mubr.f32.gmra.mrb[0].mxu0 %v602
      %v904 = vpop.f32.mrb[0].mxu0
      %v905 = vadd.f32 0.0, %v904
      %v906 = vpop.f32.mrb[0].mxu0
      %907 = vmatprep.mubr.f32.mxu0 0.0
      %908 = vmatmul.mubr.f32.gmra.mrb[0].mxu0 %v605
      %v909 = vpop.f32.mrb[0].mxu0
      %v910 = vadd.f32 0.0, %v909
      %v911 = vpop.f32.mrb[0].mxu0
      %912 = vdwg.mxu0
      %v913 = vld [vmem:[%s403] sm:$0xf]
      %v914 = vld [vmem:[%s403 + $0x4] sm:$0xf]
      %v915 = vld [vmem:[%s403 + $0x8] sm:$0xf]
      %v916 = vld [vmem:[%s403 + $0xc] sm:$0xf]
      %v917 = vld [vmem:[%s403 + $0x10] sm:$0xf]
      %v918 = vld [vmem:[%s403 + $0x14] sm:$0xf]
      %v919 = vld [vmem:[%s403 + $0x18] sm:$0xf]
      %v920 = vld [vmem:[%s403 + $0x1c] sm:$0xf]
      %v921 = vld [vmem:[%s403 + $0x20] sm:$0xf]
      %v922 = vld [vmem:[%s403 + $0x24] sm:$0xf]
      %v923 = vld [vmem:[%s403 + $0x28] sm:$0xf]
      %v924 = vld [vmem:[%s403 + $0x2c] sm:$0xf]
      %v925 = vld [vmem:[%s403 + $0x30] sm:$0xf]
      %v926 = vld [vmem:[%s403 + $0x34] sm:$0xf]
      %v927 = vld [vmem:[%s403 + $0x38] sm:$0xf]
      %v928 = vld [vmem:[%s403 + $0x3c] sm:$0xf]
      %v929 = vunpack.c.l.bf16 %v913
      %v930 = vunpack.c.l.bf16 %v914
      %v931 = vunpack.c.l.bf16 %v915
      %v932 = vunpack.c.l.bf16 %v916
      %v933 = vunpack.c.l.bf16 %v917
      %v934 = vunpack.c.l.bf16 %v918
      %v935 = vunpack.c.l.bf16 %v919
      %v936 = vunpack.c.l.bf16 %v920
      %v937 = vunpack.c.l.bf16 %v921
      %v938 = vunpack.c.l.bf16 %v922
      %v939 = vunpack.c.l.bf16 %v923
      %v940 = vunpack.c.l.bf16 %v924
      %v941 = vunpack.c.l.bf16 %v925
      %v942 = vunpack.c.l.bf16 %v926
      %v943 = vunpack.c.l.bf16 %v927
      %v944 = vunpack.c.l.bf16 %v928
      %v946 = vlaneseq
      %v947 = vshrl.u32 %v946, 7
      %v948 = vsub.s32 0, %v947
      %v949 = vrot.slane %v451, %v948
      %v951 = vmul.f32 %v929, %v949
      %v952 = vmul.f32 %v930, %v949
      %v953 = vmul.f32 %v931, %v949
      %v954 = vmul.f32 %v932, %v949
      %v955 = vmul.f32 %v933, %v949
      %v956 = vmul.f32 %v934, %v949
      %v957 = vmul.f32 %v935, %v949
      %v958 = vmul.f32 %v936, %v949
      %v959 = vmul.f32 %v937, %v949
      %v960 = vmul.f32 %v938, %v949
      %v961 = vmul.f32 %v939, %v949
      %v962 = vmul.f32 %v940, %v949
      %v963 = vmul.f32 %v941, %v949
      %v964 = vmul.f32 %v942, %v949
      %v965 = vmul.f32 %v943, %v949
      %v966 = vmul.f32 %v944, %v949
      %v967 = vlaneseq
      %v968 = vshrl.u32 %v967, 7
      %v969 = vsub.s32 0, %v968
      %v970 = vrot.slane %v455, %v969
      %v971 = vadd.f32 %v951, %v970
      %v972 = vadd.f32 %v952, %v970
      %v973 = vadd.f32 %v953, %v970
      %v974 = vadd.f32 %v954, %v970
      %v975 = vadd.f32 %v955, %v970
      %v976 = vadd.f32 %v956, %v970
      %v977 = vadd.f32 %v957, %v970
      %v978 = vadd.f32 %v958, %v970
      %v979 = vadd.f32 %v959, %v970
      %v980 = vadd.f32 %v960, %v970
      %v981 = vadd.f32 %v961, %v970
      %v982 = vadd.f32 %v962, %v970
      %v983 = vadd.f32 %v963, %v970
      %v984 = vadd.f32 %v964, %v970
      %v985 = vadd.f32 %v965, %v970
      %v986 = vadd.f32 %v966, %v970
      %v987 = vld [vmem:[%s410] sm:$0xf]
      %v988 = vld [vmem:[%s410 + $0x4] sm:$0xf]
      %v989 = vld [vmem:[%s410 + $0x8] sm:$0xf]
      %v990 = vld [vmem:[%s410 + $0xc] sm:$0xf]
      %v991 = vld [vmem:[%s410 + $0x10] sm:$0xf]
      %v992 = vld [vmem:[%s410 + $0x14] sm:$0xf]
      %v993 = vld [vmem:[%s410 + $0x18] sm:$0xf]
      %v994 = vld [vmem:[%s410 + $0x1c] sm:$0xf]
      %v995 = vld [vmem:[%s410 + $0x20] sm:$0xf]
      %v996 = vld [vmem:[%s410 + $0x24] sm:$0xf]
      %v997 = vld [vmem:[%s410 + $0x28] sm:$0xf]
      %v998 = vld [vmem:[%s410 + $0x2c] sm:$0xf]
      %v999 = vld [vmem:[%s410 + $0x30] sm:$0xf]
      %v1000 = vld [vmem:[%s410 + $0x34] sm:$0xf]
      %v1001 = vld [vmem:[%s410 + $0x38] sm:$0xf]
      %v1002 = vld [vmem:[%s410 + $0x3c] sm:$0xf]
      %v1003 = vunpack.c.l.bf16 %v987
      %v1004 = vunpack.c.l.bf16 %v988
      %v1005 = vunpack.c.l.bf16 %v989
      %v1006 = vunpack.c.l.bf16 %v990
      %v1007 = vunpack.c.l.bf16 %v991
      %v1008 = vunpack.c.l.bf16 %v992
      %v1009 = vunpack.c.l.bf16 %v993
      %v1010 = vunpack.c.l.bf16 %v994
      %v1011 = vunpack.c.l.bf16 %v995
      %v1012 = vunpack.c.l.bf16 %v996
      %v1013 = vunpack.c.l.bf16 %v997
      %v1014 = vunpack.c.l.bf16 %v998
      %v1015 = vunpack.c.l.bf16 %v999
      %v1016 = vunpack.c.l.bf16 %v1000
      %v1017 = vunpack.c.l.bf16 %v1001
      %v1018 = vunpack.c.l.bf16 %v1002
      %v1020 = vlaneseq
      %v1021 = vshrl.u32 %v1020, 7
      %v1022 = vsub.s32 0, %v1021
      %v1023 = vrot.slane %v452, %v1022
      %v1025 = vmul.f32 %v1003, %v1023
      %v1026 = vmul.f32 %v1004, %v1023
      %v1027 = vmul.f32 %v1005, %v1023
      %v1028 = vmul.f32 %v1006, %v1023
      %v1029 = vmul.f32 %v1007, %v1023
      %v1030 = vmul.f32 %v1008, %v1023
      %v1031 = vmul.f32 %v1009, %v1023
      %v1032 = vmul.f32 %v1010, %v1023
      %v1033 = vmul.f32 %v1011, %v1023
      %v1034 = vmul.f32 %v1012, %v1023
      %v1035 = vmul.f32 %v1013, %v1023
      %v1036 = vmul.f32 %v1014, %v1023
      %v1037 = vmul.f32 %v1015, %v1023
      %v1038 = vmul.f32 %v1016, %v1023
      %v1039 = vmul.f32 %v1017, %v1023
      %v1040 = vmul.f32 %v1018, %v1023
      %v1041 = vlaneseq
      %v1042 = vshrl.u32 %v1041, 7
      %v1043 = vsub.s32 0, %v1042
      %v1044 = vrot.slane %v456, %v1043
      %v1045 = vadd.f32 %v1025, %v1044
      %v1046 = vadd.f32 %v1026, %v1044
      %v1047 = vadd.f32 %v1027, %v1044
      %v1048 = vadd.f32 %v1028, %v1044
      %v1049 = vadd.f32 %v1029, %v1044
      %v1050 = vadd.f32 %v1030, %v1044
      %v1051 = vadd.f32 %v1031, %v1044
      %v1052 = vadd.f32 %v1032, %v1044
      %v1053 = vadd.f32 %v1033, %v1044
      %v1054 = vadd.f32 %v1034, %v1044
      %v1055 = vadd.f32 %v1035, %v1044
      %v1056 = vadd.f32 %v1036, %v1044
      %v1057 = vadd.f32 %v1037, %v1044
      %v1058 = vadd.f32 %v1038, %v1044
      %v1059 = vadd.f32 %v1039, %v1044
      %v1060 = vadd.f32 %v1040, %v1044
      %v1061 = vmul.f32 %v971, %v676
      %v1062 = vmul.f32 %v972, %v682
      %v1063 = vmul.f32 %v973, %v688
      %v1064 = vmul.f32 %v974, %v694
      %v1065 = vmul.f32 %v975, %v700
      %v1066 = vmul.f32 %v976, %v706
      %v1067 = vmul.f32 %v977, %v712
      %v1068 = vmul.f32 %v978, %v718
      %v1069 = vmul.f32 %v979, %v724
      %v1070 = vmul.f32 %v980, %v730
      %v1071 = vmul.f32 %v981, %v736
      %v1072 = vmul.f32 %v982, %v742
      %v1073 = vmul.f32 %v983, %v748
      %v1074 = vmul.f32 %v984, %v754
      %v1075 = vmul.f32 %v985, %v760
      %v1076 = vmul.f32 %v986, %v766
      %1077 = vadd.xlane.f32.xlu0 %v1061
      %v1078 = vpop.xlane.xlu0 %1077
      %1079 = vadd.xlane.f32.xlu0 %v1062
      %v1080 = vpop.xlane.xlu0 %1079
      %1081 = vadd.xlane.f32.xlu0 %v1063
      %v1082 = vpop.xlane.xlu0 %1081
      %1083 = vadd.xlane.f32.xlu0 %v1064
      %v1084 = vpop.xlane.xlu0 %1083
      %1085 = vadd.xlane.f32.xlu0 %v1065
      %v1086 = vpop.xlane.xlu0 %1085
      %1087 = vadd.xlane.f32.xlu0 %v1066
      %v1088 = vpop.xlane.xlu0 %1087
      %1089 = vadd.xlane.f32.xlu0 %v1067
      %v1090 = vpop.xlane.xlu0 %1089
      %1091 = vadd.xlane.f32.xlu0 %v1068
      %v1092 = vpop.xlane.xlu0 %1091
      %1093 = vadd.xlane.f32.xlu0 %v1069
      %v1094 = vpop.xlane.xlu0 %1093
      %1095 = vadd.xlane.f32.xlu0 %v1070
      %v1096 = vpop.xlane.xlu0 %1095
      %1097 = vadd.xlane.f32.xlu0 %v1071
      %v1098 = vpop.xlane.xlu0 %1097
      %1099 = vadd.xlane.f32.xlu0 %v1072
      %v1100 = vpop.xlane.xlu0 %1099
      %1101 = vadd.xlane.f32.xlu0 %v1073
      %v1102 = vpop.xlane.xlu0 %1101
      %1103 = vadd.xlane.f32.xlu0 %v1074
      %v1104 = vpop.xlane.xlu0 %1103
      %1105 = vadd.xlane.f32.xlu0 %v1075
      %v1106 = vpop.xlane.xlu0 %1105
      %1107 = vadd.xlane.f32.xlu0 %v1076
      %v1108 = vpop.xlane.xlu0 %1107
      %v1109 = vmul.f32 %v1045, %v835
      %v1110 = vmul.f32 %v1046, %v840
      %v1111 = vmul.f32 %v1047, %v845
      %v1112 = vmul.f32 %v1048, %v850
      %v1113 = vmul.f32 %v1049, %v855
      %v1114 = vmul.f32 %v1050, %v860
      %v1115 = vmul.f32 %v1051, %v865
      %v1116 = vmul.f32 %v1052, %v870
      %v1117 = vmul.f32 %v1053, %v875
      %v1118 = vmul.f32 %v1054, %v880
      %v1119 = vmul.f32 %v1055, %v885
      %v1120 = vmul.f32 %v1056, %v890
      %v1121 = vmul.f32 %v1057, %v895
      %v1122 = vmul.f32 %v1058, %v900
      %v1123 = vmul.f32 %v1059, %v905
      %v1124 = vmul.f32 %v1060, %v910
      %1125 = vadd.xlane.f32.xlu0 %v1109
      %v1126 = vpop.xlane.xlu0 %1125
      %1127 = vadd.xlane.f32.xlu0 %v1110
      %v1128 = vpop.xlane.xlu0 %1127
      %1129 = vadd.xlane.f32.xlu0 %v1111
      %v1130 = vpop.xlane.xlu0 %1129
      %1131 = vadd.xlane.f32.xlu0 %v1112
      %v1132 = vpop.xlane.xlu0 %1131
      %1133 = vadd.xlane.f32.xlu0 %v1113
      %v1134 = vpop.xlane.xlu0 %1133
      %1135 = vadd.xlane.f32.xlu0 %v1114
      %v1136 = vpop.xlane.xlu0 %1135
      %1137 = vadd.xlane.f32.xlu0 %v1115
      %v1138 = vpop.xlane.xlu0 %1137
      %1139 = vadd.xlane.f32.xlu0 %v1116
      %v1140 = vpop.xlane.xlu0 %1139
      %1141 = vadd.xlane.f32.xlu0 %v1117
      %v1142 = vpop.xlane.xlu0 %1141
      %1143 = vadd.xlane.f32.xlu0 %v1118
      %v1144 = vpop.xlane.xlu0 %1143
      %1145 = vadd.xlane.f32.xlu0 %v1119
      %v1146 = vpop.xlane.xlu0 %1145
      %1147 = vadd.xlane.f32.xlu0 %v1120
      %v1148 = vpop.xlane.xlu0 %1147
      %1149 = vadd.xlane.f32.xlu0 %v1121
      %v1150 = vpop.xlane.xlu0 %1149
      %1151 = vadd.xlane.f32.xlu0 %v1122
      %v1152 = vpop.xlane.xlu0 %1151
      %1153 = vadd.xlane.f32.xlu0 %v1123
      %v1154 = vpop.xlane.xlu0 %1153
      %1155 = vadd.xlane.f32.xlu0 %v1124
      %v1156 = vpop.xlane.xlu0 %1155
      %v1157 = vld [vmem:[%s417] sm:$0xff]
      %v1158 = vld [vmem:[%s417 + $0x8] sm:$0xff]
      %v1159 = vld [vmem:[%s417 + $0x10] sm:$0xff]
      %v1160 = vld [vmem:[%s417 + $0x18] sm:$0xff]
      %v1161 = vld [vmem:[%s417 + $0x20] sm:$0xff]
      %v1162 = vld [vmem:[%s417 + $0x28] sm:$0xff]
      %v1163 = vld [vmem:[%s417 + $0x30] sm:$0xff]
      %v1164 = vld [vmem:[%s417 + $0x38] sm:$0xff]
      %v1165 = vld [vmem:[%s417 + $0x40] sm:$0xff]
      %v1166 = vld [vmem:[%s417 + $0x48] sm:$0xff]
      %v1167 = vld [vmem:[%s417 + $0x50] sm:$0xff]
      %v1168 = vld [vmem:[%s417 + $0x58] sm:$0xff]
      %v1169 = vld [vmem:[%s417 + $0x60] sm:$0xff]
      %v1170 = vld [vmem:[%s417 + $0x68] sm:$0xff]
      %v1171 = vld [vmem:[%s417 + $0x70] sm:$0xff]
      %v1172 = vld [vmem:[%s417 + $0x78] sm:$0xff]
      %v1173 = vmul.f32 %v1157, %v674
      %v1174 = vmul.f32 %v1158, %v680
      %v1175 = vmul.f32 %v1159, %v686
      %v1176 = vmul.f32 %v1160, %v692
      %v1177 = vmul.f32 %v1161, %v698
      %v1178 = vmul.f32 %v1162, %v704
      %v1179 = vmul.f32 %v1163, %v710
      %v1180 = vmul.f32 %v1164, %v716
      %v1181 = vmul.f32 %v1165, %v722
      %v1182 = vmul.f32 %v1166, %v728
      %v1183 = vmul.f32 %v1167, %v734
      %v1184 = vmul.f32 %v1168, %v740
      %v1185 = vmul.f32 %v1169, %v746
      %v1186 = vmul.f32 %v1170, %v752
      %v1187 = vmul.f32 %v1171, %v758
      %v1188 = vmul.f32 %v1172, %v764
      %v1189 = vld [vmem:[%s423] sm:$0xff]
      %v1190 = vld [vmem:[%s423 + $0x8] sm:$0xff]
      %v1191 = vld [vmem:[%s423 + $0x10] sm:$0xff]
      %v1192 = vld [vmem:[%s423 + $0x18] sm:$0xff]
      %v1193 = vld [vmem:[%s423 + $0x20] sm:$0xff]
      %v1194 = vld [vmem:[%s423 + $0x28] sm:$0xff]
      %v1195 = vld [vmem:[%s423 + $0x30] sm:$0xff]
      %v1196 = vld [vmem:[%s423 + $0x38] sm:$0xff]
      %v1197 = vld [vmem:[%s423 + $0x40] sm:$0xff]
      %v1198 = vld [vmem:[%s423 + $0x48] sm:$0xff]
      %v1199 = vld [vmem:[%s423 + $0x50] sm:$0xff]
      %v1200 = vld [vmem:[%s423 + $0x58] sm:$0xff]
      %v1201 = vld [vmem:[%s423 + $0x60] sm:$0xff]
      %v1202 = vld [vmem:[%s423 + $0x68] sm:$0xff]
      %v1203 = vld [vmem:[%s423 + $0x70] sm:$0xff]
      %v1204 = vld [vmem:[%s423 + $0x78] sm:$0xff]
      %v1205 = vmul.f32 %v1173, %v1189
      %v1206 = vmul.f32 %v1174, %v1190
      %v1207 = vmul.f32 %v1175, %v1191
      %v1208 = vmul.f32 %v1176, %v1192
      %v1209 = vmul.f32 %v1177, %v1193
      %v1210 = vmul.f32 %v1178, %v1194
      %v1211 = vmul.f32 %v1179, %v1195
      %v1212 = vmul.f32 %v1180, %v1196
      %v1213 = vmul.f32 %v1181, %v1197
      %v1214 = vmul.f32 %v1182, %v1198
      %v1215 = vmul.f32 %v1183, %v1199
      %v1216 = vmul.f32 %v1184, %v1200
      %v1217 = vmul.f32 %v1185, %v1201
      %v1218 = vmul.f32 %v1186, %v1202
      %v1219 = vmul.f32 %v1187, %v1203
      %v1220 = vmul.f32 %v1188, %v1204
      %1221 = vadd.xlane.f32.xlu0 %v1205
      %v1222 = vpop.xlane.xlu0 %1221
      %1223 = vadd.xlane.f32.xlu0 %v1206
      %v1224 = vpop.xlane.xlu0 %1223
      %1225 = vadd.xlane.f32.xlu0 %v1207
      %v1226 = vpop.xlane.xlu0 %1225
      %1227 = vadd.xlane.f32.xlu0 %v1208
      %v1228 = vpop.xlane.xlu0 %1227
      %1229 = vadd.xlane.f32.xlu0 %v1209
      %v1230 = vpop.xlane.xlu0 %1229
      %1231 = vadd.xlane.f32.xlu0 %v1210
      %v1232 = vpop.xlane.xlu0 %1231
      %1233 = vadd.xlane.f32.xlu0 %v1211
      %v1234 = vpop.xlane.xlu0 %1233
      %1235 = vadd.xlane.f32.xlu0 %v1212
      %v1236 = vpop.xlane.xlu0 %1235
      %1237 = vadd.xlane.f32.xlu0 %v1213
      %v1238 = vpop.xlane.xlu0 %1237
      %1239 = vadd.xlane.f32.xlu0 %v1214
      %v1240 = vpop.xlane.xlu0 %1239
      %1241 = vadd.xlane.f32.xlu0 %v1215
      %v1242 = vpop.xlane.xlu0 %1241
      %1243 = vadd.xlane.f32.xlu0 %v1216
      %v1244 = vpop.xlane.xlu0 %1243
      %1245 = vadd.xlane.f32.xlu0 %v1217
      %v1246 = vpop.xlane.xlu0 %1245
      %1247 = vadd.xlane.f32.xlu0 %v1218
      %v1248 = vpop.xlane.xlu0 %1247
      %1249 = vadd.xlane.f32.xlu0 %v1219
      %v1250 = vpop.xlane.xlu0 %1249
      %1251 = vadd.xlane.f32.xlu0 %v1220
      %v1252 = vpop.xlane.xlu0 %1251
      %v1253 = vxor.u32 %v1222, 2147483648
      %v1254 = vxor.u32 %v1224, 2147483648
      %v1255 = vxor.u32 %v1226, 2147483648
      %v1256 = vxor.u32 %v1228, 2147483648
      %v1257 = vxor.u32 %v1230, 2147483648
      %v1258 = vxor.u32 %v1232, 2147483648
      %v1259 = vxor.u32 %v1234, 2147483648
      %v1260 = vxor.u32 %v1236, 2147483648
      %v1261 = vxor.u32 %v1238, 2147483648
      %v1262 = vxor.u32 %v1240, 2147483648
      %v1263 = vxor.u32 %v1242, 2147483648
      %v1264 = vxor.u32 %v1244, 2147483648
      %v1265 = vxor.u32 %v1246, 2147483648
      %v1266 = vxor.u32 %v1248, 2147483648
      %v1267 = vxor.u32 %v1250, 2147483648
      %v1268 = vxor.u32 %v1252, 2147483648
      %v1269 = vmul.f32 %v1253, 1.442695
      %v1270 = vpow.pop %v1269
      %v1271 = vmul.f32 %v1254, 1.442695
      %v1272 = vpow.pop %v1271
      %v1273 = vmul.f32 %v1255, 1.442695
      %v1274 = vpow.pop %v1273
      %v1275 = vmul.f32 %v1256, 1.442695
      %v1276 = vpow.pop %v1275
      %v1277 = vmul.f32 %v1257, 1.442695
      %v1278 = vpow.pop %v1277
      %v1279 = vmul.f32 %v1258, 1.442695
      %v1280 = vpow.pop %v1279
      %v1281 = vmul.f32 %v1259, 1.442695
      %v1282 = vpow.pop %v1281
      %v1283 = vmul.f32 %v1260, 1.442695
      %v1284 = vpow.pop %v1283
      %v1285 = vmul.f32 %v1261, 1.442695
      %v1286 = vpow.pop %v1285
      %v1287 = vmul.f32 %v1262, 1.442695
      %v1288 = vpow.pop %v1287
      %v1289 = vmul.f32 %v1263, 1.442695
      %v1290 = vpow.pop %v1289
      %v1291 = vmul.f32 %v1264, 1.442695
      %v1292 = vpow.pop %v1291
      %v1293 = vmul.f32 %v1265, 1.442695
      %v1294 = vpow.pop %v1293
      %v1295 = vmul.f32 %v1266, 1.442695
      %v1296 = vpow.pop %v1295
      %v1297 = vmul.f32 %v1267, 1.442695
      %v1298 = vpow.pop %v1297
      %v1299 = vmul.f32 %v1268, 1.442695
      %v1300 = vpow.pop %v1299
      %v1301 = vadd.f32 %v1270, 1.0
      %v1302 = vadd.f32 %v1272, 1.0
      %v1303 = vadd.f32 %v1274, 1.0
      %v1304 = vadd.f32 %v1276, 1.0
      %v1305 = vadd.f32 %v1278, 1.0
      %v1306 = vadd.f32 %v1280, 1.0
      %v1307 = vadd.f32 %v1282, 1.0
      %v1308 = vadd.f32 %v1284, 1.0
      %v1309 = vadd.f32 %v1286, 1.0
      %v1310 = vadd.f32 %v1288, 1.0
      %v1311 = vadd.f32 %v1290, 1.0
      %v1312 = vadd.f32 %v1292, 1.0
      %v1313 = vadd.f32 %v1294, 1.0
      %v1314 = vadd.f32 %v1296, 1.0
      %v1315 = vadd.f32 %v1298, 1.0
      %v1316 = vadd.f32 %v1300, 1.0
      %v1317 = vrcp.pop %v1301
      %v1318 = vmul.f32 1.0, %v1317
      %v1319 = vrcp.pop %v1302
      %v1320 = vmul.f32 1.0, %v1319
      %v1321 = vrcp.pop %v1303
      %v1322 = vmul.f32 1.0, %v1321
      %v1323 = vrcp.pop %v1304
      %v1324 = vmul.f32 1.0, %v1323
      %v1325 = vrcp.pop %v1305
      %v1326 = vmul.f32 1.0, %v1325
      %v1327 = vrcp.pop %v1306
      %v1328 = vmul.f32 1.0, %v1327
      %v1329 = vrcp.pop %v1307
      %v1330 = vmul.f32 1.0, %v1329
      %v1331 = vrcp.pop %v1308
      %v1332 = vmul.f32 1.0, %v1331
      %v1333 = vrcp.pop %v1309
      %v1334 = vmul.f32 1.0, %v1333
      %v1335 = vrcp.pop %v1310
      %v1336 = vmul.f32 1.0, %v1335
      %v1337 = vrcp.pop %v1311
      %v1338 = vmul.f32 1.0, %v1337
      %v1339 = vrcp.pop %v1312
      %v1340 = vmul.f32 1.0, %v1339
      %v1341 = vrcp.pop %v1313
      %v1342 = vmul.f32 1.0, %v1341
      %v1343 = vrcp.pop %v1314
      %v1344 = vmul.f32 1.0, %v1343
      %v1345 = vrcp.pop %v1315
      %v1346 = vmul.f32 1.0, %v1345
      %v1347 = vrcp.pop %v1316
      %v1348 = vmul.f32 1.0, %v1347
      %v1349 = vmul.f32 %v1318, 20.0
      %v1350 = vmul.f32 %v1320, 20.0
      %v1351 = vmul.f32 %v1322, 20.0
      %v1352 = vmul.f32 %v1324, 20.0
      %v1353 = vmul.f32 %v1326, 20.0
      %v1354 = vmul.f32 %v1328, 20.0
      %v1355 = vmul.f32 %v1330, 20.0
      %v1356 = vmul.f32 %v1332, 20.0
      %v1357 = vmul.f32 %v1334, 20.0
      %v1358 = vmul.f32 %v1336, 20.0
      %v1359 = vmul.f32 %v1338, 20.0
      %v1360 = vmul.f32 %v1340, 20.0
      %v1361 = vmul.f32 %v1342, 20.0
      %v1362 = vmul.f32 %v1344, 20.0
      %v1363 = vmul.f32 %v1346, 20.0
      %v1364 = vmul.f32 %v1348, 20.0
      %v1365 = vxor.u32 %v1078, 2147483648
      %v1366 = vxor.u32 %v1080, 2147483648
      %v1367 = vxor.u32 %v1082, 2147483648
      %v1368 = vxor.u32 %v1084, 2147483648
      %v1369 = vxor.u32 %v1086, 2147483648
      %v1370 = vxor.u32 %v1088, 2147483648
      %v1371 = vxor.u32 %v1090, 2147483648
      %v1372 = vxor.u32 %v1092, 2147483648
      %v1373 = vxor.u32 %v1094, 2147483648
      %v1374 = vxor.u32 %v1096, 2147483648
      %v1375 = vxor.u32 %v1098, 2147483648
      %v1376 = vxor.u32 %v1100, 2147483648
      %v1377 = vxor.u32 %v1102, 2147483648
      %v1378 = vxor.u32 %v1104, 2147483648
      %v1379 = vxor.u32 %v1106, 2147483648
      %v1380 = vxor.u32 %v1108, 2147483648
      %v1381 = vmul.f32 %v1365, 1.442695
      %v1382 = vpow.pop %v1381
      %v1383 = vmul.f32 %v1366, 1.442695
      %v1384 = vpow.pop %v1383
      %v1385 = vmul.f32 %v1367, 1.442695
      %v1386 = vpow.pop %v1385
      %v1387 = vmul.f32 %v1368, 1.442695
      %v1388 = vpow.pop %v1387
      %v1389 = vmul.f32 %v1369, 1.442695
      %v1390 = vpow.pop %v1389
      %v1391 = vmul.f32 %v1370, 1.442695
      %v1392 = vpow.pop %v1391
      %v1393 = vmul.f32 %v1371, 1.442695
      %v1394 = vpow.pop %v1393
      %v1395 = vmul.f32 %v1372, 1.442695
      %v1396 = vpow.pop %v1395
      %v1397 = vmul.f32 %v1373, 1.442695
      %v1398 = vpow.pop %v1397
      %v1399 = vmul.f32 %v1374, 1.442695
      %v1400 = vpow.pop %v1399
      %v1401 = vmul.f32 %v1375, 1.442695
      %v1402 = vpow.pop %v1401
      %v1403 = vmul.f32 %v1376, 1.442695
      %v1404 = vpow.pop %v1403
      %v1405 = vmul.f32 %v1377, 1.442695
      %v1406 = vpow.pop %v1405
      %v1407 = vmul.f32 %v1378, 1.442695
      %v1408 = vpow.pop %v1407
      %v1409 = vmul.f32 %v1379, 1.442695
      %v1410 = vpow.pop %v1409
      %v1411 = vmul.f32 %v1380, 1.442695
      %v1412 = vpow.pop %v1411
      %v1413 = vadd.f32 %v1382, 1.0
      %v1414 = vadd.f32 %v1384, 1.0
      %v1415 = vadd.f32 %v1386, 1.0
      %v1416 = vadd.f32 %v1388, 1.0
      %v1417 = vadd.f32 %v1390, 1.0
      %v1418 = vadd.f32 %v1392, 1.0
      %v1419 = vadd.f32 %v1394, 1.0
      %v1420 = vadd.f32 %v1396, 1.0
      %v1421 = vadd.f32 %v1398, 1.0
      %v1422 = vadd.f32 %v1400, 1.0
      %v1423 = vadd.f32 %v1402, 1.0
      %v1424 = vadd.f32 %v1404, 1.0
      %v1425 = vadd.f32 %v1406, 1.0
      %v1426 = vadd.f32 %v1408, 1.0
      %v1427 = vadd.f32 %v1410, 1.0
      %v1428 = vadd.f32 %v1412, 1.0
      %v1429 = vrcp.pop %v1413
      %v1430 = vmul.f32 1.0, %v1429
      %v1431 = vrcp.pop %v1414
      %v1432 = vmul.f32 1.0, %v1431
      %v1433 = vrcp.pop %v1415
      %v1434 = vmul.f32 1.0, %v1433
      %v1435 = vrcp.pop %v1416
      %v1436 = vmul.f32 1.0, %v1435
      %v1437 = vrcp.pop %v1417
      %v1438 = vmul.f32 1.0, %v1437
      %v1439 = vrcp.pop %v1418
      %v1440 = vmul.f32 1.0, %v1439
      %v1441 = vrcp.pop %v1419
      %v1442 = vmul.f32 1.0, %v1441
      %v1443 = vrcp.pop %v1420
      %v1444 = vmul.f32 1.0, %v1443
      %v1445 = vrcp.pop %v1421
      %v1446 = vmul.f32 1.0, %v1445
      %v1447 = vrcp.pop %v1422
      %v1448 = vmul.f32 1.0, %v1447
      %v1449 = vrcp.pop %v1423
      %v1450 = vmul.f32 1.0, %v1449
      %v1451 = vrcp.pop %v1424
      %v1452 = vmul.f32 1.0, %v1451
      %v1453 = vrcp.pop %v1425
      %v1454 = vmul.f32 1.0, %v1453
      %v1455 = vrcp.pop %v1426
      %v1456 = vmul.f32 1.0, %v1455
      %v1457 = vrcp.pop %v1427
      %v1458 = vmul.f32 1.0, %v1457
      %v1459 = vrcp.pop %v1428
      %v1460 = vmul.f32 1.0, %v1459
      %v1461 = vmul.f32 %v1349, %v1430
      %v1462 = vmul.f32 %v1350, %v1432
      %v1463 = vmul.f32 %v1351, %v1434
      %v1464 = vmul.f32 %v1352, %v1436
      %v1465 = vmul.f32 %v1353, %v1438
      %v1466 = vmul.f32 %v1354, %v1440
      %v1467 = vmul.f32 %v1355, %v1442
      %v1468 = vmul.f32 %v1356, %v1444
      %v1469 = vmul.f32 %v1357, %v1446
      %v1470 = vmul.f32 %v1358, %v1448
      %v1471 = vmul.f32 %v1359, %v1450
      %v1472 = vmul.f32 %v1360, %v1452
      %v1473 = vmul.f32 %v1361, %v1454
      %v1474 = vmul.f32 %v1362, %v1456
      %v1475 = vmul.f32 %v1363, %v1458
      %v1476 = vmul.f32 %v1364, %v1460
      %v1477 = vxor.u32 %v1126, 2147483648
      %v1478 = vxor.u32 %v1128, 2147483648
      %v1479 = vxor.u32 %v1130, 2147483648
      %v1480 = vxor.u32 %v1132, 2147483648
      %v1481 = vxor.u32 %v1134, 2147483648
      %v1482 = vxor.u32 %v1136, 2147483648
      %v1483 = vxor.u32 %v1138, 2147483648
      %v1484 = vxor.u32 %v1140, 2147483648
      %v1485 = vxor.u32 %v1142, 2147483648
      %v1486 = vxor.u32 %v1144, 2147483648
      %v1487 = vxor.u32 %v1146, 2147483648
      %v1488 = vxor.u32 %v1148, 2147483648
      %v1489 = vxor.u32 %v1150, 2147483648
      %v1490 = vxor.u32 %v1152, 2147483648
      %v1491 = vxor.u32 %v1154, 2147483648
      %v1492 = vxor.u32 %v1156, 2147483648
      %v1493 = vmul.f32 %v1477, 1.442695
      %v1494 = vpow.pop %v1493
      %v1495 = vmul.f32 %v1478, 1.442695
      %v1496 = vpow.pop %v1495
      %v1497 = vmul.f32 %v1479, 1.442695
      %v1498 = vpow.pop %v1497
      %v1499 = vmul.f32 %v1480, 1.442695
      %v1500 = vpow.pop %v1499
      %v1501 = vmul.f32 %v1481, 1.442695
      %v1502 = vpow.pop %v1501
      %v1503 = vmul.f32 %v1482, 1.442695
      %v1504 = vpow.pop %v1503
      %v1505 = vmul.f32 %v1483, 1.442695
      %v1506 = vpow.pop %v1505
      %v1507 = vmul.f32 %v1484, 1.442695
      %v1508 = vpow.pop %v1507
      %v1509 = vmul.f32 %v1485, 1.442695
      %v1510 = vpow.pop %v1509
      %v1511 = vmul.f32 %v1486, 1.442695
      %v1512 = vpow.pop %v1511
      %v1513 = vmul.f32 %v1487, 1.442695
      %v1514 = vpow.pop %v1513
      %v1515 = vmul.f32 %v1488, 1.442695
      %v1516 = vpow.pop %v1515
      %v1517 = vmul.f32 %v1489, 1.442695
      %v1518 = vpow.pop %v1517
      %v1519 = vmul.f32 %v1490, 1.442695
      %v1520 = vpow.pop %v1519
      %v1521 = vmul.f32 %v1491, 1.442695
      %v1522 = vpow.pop %v1521
      %v1523 = vmul.f32 %v1492, 1.442695
      %v1524 = vpow.pop %v1523
      %v1525 = vadd.f32 %v1494, 1.0
      %v1526 = vadd.f32 %v1496, 1.0
      %v1527 = vadd.f32 %v1498, 1.0
      %v1528 = vadd.f32 %v1500, 1.0
      %v1529 = vadd.f32 %v1502, 1.0
      %v1530 = vadd.f32 %v1504, 1.0
      %v1531 = vadd.f32 %v1506, 1.0
      %v1532 = vadd.f32 %v1508, 1.0
      %v1533 = vadd.f32 %v1510, 1.0
      %v1534 = vadd.f32 %v1512, 1.0
      %v1535 = vadd.f32 %v1514, 1.0
      %v1536 = vadd.f32 %v1516, 1.0
      %v1537 = vadd.f32 %v1518, 1.0
      %v1538 = vadd.f32 %v1520, 1.0
      %v1539 = vadd.f32 %v1522, 1.0
      %v1540 = vadd.f32 %v1524, 1.0
      %v1541 = vrcp.pop %v1525
      %v1542 = vmul.f32 1.0, %v1541
      %v1543 = vrcp.pop %v1526
      %v1544 = vmul.f32 1.0, %v1543
      %v1545 = vrcp.pop %v1527
      %v1546 = vmul.f32 1.0, %v1545
      %v1547 = vrcp.pop %v1528
      %v1548 = vmul.f32 1.0, %v1547
      %v1549 = vrcp.pop %v1529
      %v1550 = vmul.f32 1.0, %v1549
      %v1551 = vrcp.pop %v1530
      %v1552 = vmul.f32 1.0, %v1551
      %v1553 = vrcp.pop %v1531
      %v1554 = vmul.f32 1.0, %v1553
      %v1555 = vrcp.pop %v1532
      %v1556 = vmul.f32 1.0, %v1555
      %v1557 = vrcp.pop %v1533
      %v1558 = vmul.f32 1.0, %v1557
      %v1559 = vrcp.pop %v1534
      %v1560 = vmul.f32 1.0, %v1559
      %v1561 = vrcp.pop %v1535
      %v1562 = vmul.f32 1.0, %v1561
      %v1563 = vrcp.pop %v1536
      %v1564 = vmul.f32 1.0, %v1563
      %v1565 = vrcp.pop %v1537
      %v1566 = vmul.f32 1.0, %v1565
      %v1567 = vrcp.pop %v1538
      %v1568 = vmul.f32 1.0, %v1567
      %v1569 = vrcp.pop %v1539
      %v1570 = vmul.f32 1.0, %v1569
      %v1571 = vrcp.pop %v1540
      %v1572 = vmul.f32 1.0, %v1571
      %v1573 = vmul.f32 %v1461, %v1542
      %v1574 = vmul.f32 %v1462, %v1544
      %v1575 = vmul.f32 %v1463, %v1546
      %v1576 = vmul.f32 %v1464, %v1548
      %v1577 = vmul.f32 %v1465, %v1550
      %v1578 = vmul.f32 %v1466, %v1552
      %v1579 = vmul.f32 %v1467, %v1554
      %v1580 = vmul.f32 %v1468, %v1556
      %v1581 = vmul.f32 %v1469, %v1558
      %v1582 = vmul.f32 %v1470, %v1560
      %v1583 = vmul.f32 %v1471, %v1562
      %v1584 = vmul.f32 %v1472, %v1564
      %v1585 = vmul.f32 %v1473, %v1566
      %v1586 = vmul.f32 %v1474, %v1568
      %v1587 = vmul.f32 %v1475, %v1570
      %v1588 = vmul.f32 %v1476, %v1572
      %vm1589 = vcmask 7168
      %1590 = vst.msk [vmem:[%s429] sm:$0xff] %vm1589, %v1573
      %1591 = vst.msk [vmem:[%s429 + $0x8] sm:$0xff] %vm1589, %v1574
      %1592 = vst.msk [vmem:[%s429 + $0x10] sm:$0xff] %vm1589, %v1575
      %1593 = vst.msk [vmem:[%s429 + $0x18] sm:$0xff] %vm1589, %v1576
      %1594 = vst.msk [vmem:[%s429 + $0x20] sm:$0xff] %vm1589, %v1577
      %1595 = vst.msk [vmem:[%s429 + $0x28] sm:$0xff] %vm1589, %v1578
      %1596 = vst.msk [vmem:[%s429 + $0x30] sm:$0xff] %vm1589, %v1579
      %1597 = vst.msk [vmem:[%s429 + $0x38] sm:$0xff] %vm1589, %v1580
      %1598 = vst.msk [vmem:[%s429 + $0x40] sm:$0xff] %vm1589, %v1581
      %1599 = vst.msk [vmem:[%s429 + $0x48] sm:$0xff] %vm1589, %v1582
      %1600 = vst.msk [vmem:[%s429 + $0x50] sm:$0xff] %vm1589, %v1583
      %1601 = vst.msk [vmem:[%s429 + $0x58] sm:$0xff] %vm1589, %v1584
      %1602 = vst.msk [vmem:[%s429 + $0x60] sm:$0xff] %vm1589, %v1585
      %1603 = vst.msk [vmem:[%s429 + $0x68] sm:$0xff] %vm1589, %v1586
      %1604 = vst.msk [vmem:[%s429 + $0x70] sm:$0xff] %vm1589, %v1587
      %1605 = vst.msk [vmem:[%s429 + $0x78] sm:$0xff] %vm1589, %v1588
      %s1606 = smul.u32 16, %s20
      %p1607 = scmp.lt.s32.totalorder %s1606, 31
      %s1608 = scalar_select %p1607, %s1606, 31
      %s1609 = smul.addr %s1608, 8
      %s1610 = scalar_lea.vmem %s9, %s1609
      // Predicated region
      $region57: #{only_image_forward.3} parent=55 // pred_check
        %p1611 = pneg %p254
      $region58: #{only_image_forward.3} parent=55 // pred_check_branch
        %1613 = sbr.rel (%p1611) target = $region60
      $region59: #{only_image_forward.3} parent=55 // pred_region
        %s1614 = smul.u32 16, %s20
      $region60: #{only_image_forward.3} parent=55 // pred_fallthru
        _
    $region56: #{only_image_forward.3} parent=5 // pred_fallthru
      _
    %p1615 = scmp.le.s32.totalorder 2, %s15
    // Predicated region
    $region61: #{only_image_forward.3} parent=5 // pred_check
      %p1616 = pneg %p1615
    $region62: #{only_image_forward.3} parent=5 // pred_check_branch
      %1618 = sbr.rel (%p1616) target = $region64
    $region63: #{only_image_forward.3} parent=5 // pred_region
      %s1619 = ssub.s32 %s15, 2
      // Predicated region
      $region65: #{only_image_forward.3} parent=63 // pred_check
        %p1620 = pneg %p260
      $region66: #{only_image_forward.3} parent=63 // pred_check_branch
        %1622 = sbr.rel (%p1620) target = $region68
      $region67: #{only_image_forward.3} parent=63 // pred_region
        %s1623 = smul.u32 16, %s21
        %p1624 = scmp.lt.s32.totalorder %s1623, 31
        %s1625 = scalar_select %p1624, %s1623, 31
        %s1626 = smul.addr %s1625, 8
        %s1627 = scalar_lea.vmem %s9, %s1626
      $region68: #{only_image_forward.3} parent=63 // pred_fallthru
        _
    $region64: #{only_image_forward.3} parent=5 // pred_fallthru
      _
  $region6: #{only_image_forward.3} parent=0 // loop_footer
    %s19 = sadd.s32 1, %s15
  $region7: #{only_image_forward.3} parent=0 // loop_footer_branch
    %14 = sbr.rel target = $region3
  $region8: #{only_image_forward.3} parent=0 // loop_exit
    _

</llo_original>
